<compile_context>
chip_gen: v7x
topology: tpu7x:2x2x1
jax: 0.10.0
libtpu: 0.0.40
codegen_flags: <defaults>
</compile_context>

<pallas_src>
import jax
import jax.numpy as jnp
from jax import lax
from jax.experimental import pallas as pl
from jax.experimental.pallas import tpu as pltpu


def _round_up(x, m):
    return -(-x // m) * m


# ------------------------------ fused kernel ------------------------------- #

def make_encoder_kernel(plan):
    """plan entries (forward order):
         ("pool",)                      -> consumes next (Q, P) pool refs
         ("conv", layer_idx, h, K, N)   -> K = n*w*ci, N = n*w*co

    Kernel ref layout: [x, w_pack, b_pack, *pool_refs..., out, act_scratch]
      w_pack: (L, 3, maxK, maxN) bf16 block-tridiagonal (dx + padding folded),
              block-diagonal over batch; zero-padded tails never read.
      b_pack: (L, maxN) f32 lane-tiled bias rows.
    """

    def kernel(*refs):
        x_ref, w_ref, b_ref = refs[0], refs[1], refs[2]
        o_ref, act = refs[-2], refs[-1]
        pool_refs = refs[3:-2]

        cur = x_ref[...]                       # (h, n*w*c) f32 lane-dense slab
        pi = 0
        for op in plan:
            if op[0] == "pool":
                q = pool_refs[pi][...]         # (h/2, h)            row pool (0.5)
                p = pool_refs[pi + 1][...]     # (n*w*c, n*(w/2)*c)  col pool (0.5)
                pi += 2
                cur = jnp.dot(
                    jnp.dot(q, cur, preferred_element_type=jnp.float32),
                    p, preferred_element_type=jnp.float32)
            else:
                _, li, h, kl, nl = op
                # Stage bf16 activation slab once per conv (single cast); only the
                # two halo rows need zeros -- no full-slab zeroing, no column halo.
                zrow = jnp.zeros((1, kl), jnp.bfloat16)
                act[0:1, :kl] = zrow
                act[h + 1:h + 2, :kl] = zrow
                act[1:h + 1, :kl] = cur.astype(jnp.bfloat16)

                acc = jnp.zeros((h, nl), jnp.float32)
                for dy in range(3):            # 3 row taps; dx folded into weight
                    a = act[dy:dy + h, :kl]                    # lane offset 0
                    wk = w_ref[li, dy, :kl, :nl]               # block-tridiag bf16
                    acc = acc + jnp.dot(a, wk,
                                        preferred_element_type=jnp.float32)
                cur = jnp.maximum(acc + b_ref[li:li + 1, :nl], 0.0)

        o_ref[...] = cur                       # lane-dense (h_out, n*w_out*c_out)

    return kernel


# ------------------------------ Encoder module ----------------------------- #

def init_encoder_params(key, input_channels, num_filters, no_convs_per_block,
                        posterior=False):
    """Deterministic synthetic init (module's init_weights is replaced by this).
    Returns a list of (w_hwio, bias) per conv layer, in forward order."""
    in_ch = input_channels + (1 if posterior else 0)
    params = []
    prev = in_ch
    for i in range(len(num_filters)):
        out_ch = num_filters[i][0]
        cin = prev
        for _ in range(no_convs_per_block):
            key, kw, kb = jax.random.split(key, 3)
            w = jax.random.normal(kw, (3, 3, cin, out_ch), jnp.float32) * 0.05
            b = jax.random.normal(kb, (out_ch,), jnp.float32) * 0.05
            params.append((w, b))
            cin = out_ch
        prev = out_ch
    return params


def encoder_forward(x_nchw, params, num_filters, no_convs_per_block):
    """Forward pass of Encoder (padding=True): per block -> [AvgPool if i>0],
    then no_convs_per_block x (Conv3x3 + ReLU).  Input/output are NCHW."""
    n, cin, h, w = x_nchw.shape
    # Lane-dense slab: rows = H, lanes = [batch][W][C]; batch is folded into lanes
    # so every conv matmul fills the 256-wide MXU on v6e/v7x in a single issue.
    x_slab = (jnp.transpose(x_nchw, (2, 0, 3, 1)).astype(jnp.float32)
              .reshape(h, n * w * cin))

    plan, pool_inputs = [], []
    conv_mats, conv_bias = [], []
    cur_h, cur_w, cur_c = h, w, cin
    max_rows, li = 0, 0
    for i in range(len(num_filters)):
        cout = num_filters[i][0]
        if i != 0:
            # TODO(synk): even H/W only; true ceil_mode=True on odd sizes keeps a
            # partial window and divides by its actual element count.
            h2, w2 = cur_h // 2, cur_w // 2
            q = 0.5 * jnp.kron(jnp.eye(h2, dtype=jnp.float32),
                               jnp.ones((1, 2), jnp.float32))            # (h2, h)
            p = 0.5 * jnp.kron(
                jnp.eye(n, dtype=jnp.float32),
                jnp.kron(jnp.kron(jnp.eye(w2, dtype=jnp.float32),
                                  jnp.ones((2, 1), jnp.float32)),
                         jnp.eye(cur_c, dtype=jnp.float32)))     # (n*w*c, n*w2*c)
            plan.append(("pool",))
            pool_inputs += [q, p]
            cur_h, cur_w = h2, w2
        for _ in range(no_convs_per_block):
            w_hwio, bias = params[li]
            li += 1
            ci = w_hwio.shape[2]
            # Fold the 3 dx taps and SAME column padding into one block-tridiagonal
            # matrix per dy (edge blocks dropped), then block-diagonal over batch:
            # a single lane-dense (h, n*w*ci) @ (n*w*ci, n*w*co) matmul per row tap.
            mats = []
            for dy in range(3):
                m = sum(jnp.kron(jnp.eye(cur_w, k=1 - dx, dtype=jnp.float32),
                                 w_hwio[dy, dx])
                        for dx in range(3))                      # (w*ci, w*co)
                mats.append(jnp.kron(jnp.eye(n, dtype=jnp.float32), m))
            kd = n * cur_w * ci
            nd = n * cur_w * cout
            conv_mats.append(jnp.stack(mats))                    # (3, kd, nd)
            conv_bias.append(jnp.tile(bias, n * cur_w).astype(jnp.float32))
            plan.append(("conv", len(conv_mats) - 1, cur_h, kd, nd))
            max_rows = max(max_rows, cur_h + 2)
            cur_c = cout

    # Pack all conv weights / biases into one array each (few large DMAs instead of
    # many sub-KB DMAs); zero-padded K/N tails are never read (static :K/:N slices).
    max_k = _round_up(max(m.shape[1] for m in conv_mats), 128)
    max_n = _round_up(max(m.shape[2] for m in conv_mats), 128)
    w_pack = jnp.stack([
        jnp.pad(m, ((0, 0), (0, max_k - m.shape[1]), (0, max_n - m.shape[2])))
        for m in conv_mats]).astype(jnp.bfloat16)                # (L, 3, maxK, maxN)
    b_pack = jnp.stack([jnp.pad(b, (0, max_n - b.shape[0]))
                        for b in conv_bias])                     # (L, maxN) f32

    out_rows, out_lanes = cur_h, n * cur_w * cur_c
    # TODO(synk): a final n*w*cout that is not a multiple of 128 reintroduces masked
    #             partial stores on the output path; this config gives 256 lanes.

    inputs = [x_slab, w_pack, b_pack] + pool_inputs
    in_specs = [pl.BlockSpec(a.shape, (lambda i, _nd=a.ndim: (0,) * _nd))
                for a in inputs]
    out_spec = pl.BlockSpec((out_rows, out_lanes), lambda i: (0, 0))

    scratch = pltpu.VMEM((_round_up(max_rows, 16), max_k), jnp.bfloat16)

    out = pl.pallas_call(
        make_encoder_kernel(plan),
        out_shape=jax.ShapeDtypeStruct((out_rows, out_lanes), jnp.float32),
        grid=(1,),   # entire working set is VMEM-resident on v5e/v6e/v7x
        in_specs=in_specs,
        out_specs=out_spec,
        scratch_shapes=[scratch],
        compiler_params=pltpu.CompilerParams(dimension_semantics=("arbitrary",)),
    )(*inputs)

    out4 = out.reshape(out_rows, n, cur_w, cur_c)        # (Ho, N, Wo, Cout)
    return jnp.transpose(out4, (1, 3, 0, 2))             # -> NCHW


# ------------------------------- reference --------------------------------- #

def encoder_forward_ref(x_nchw, params, num_filters, no_convs_per_block):
    x = jnp.transpose(x_nchw, (0, 2, 3, 1)).astype(jnp.float32)
    idx = 0
    for i in range(len(num_filters)):
        if i != 0:
            x = lax.reduce_window(x, 0.0, lax.add,
                                  (1, 2, 2, 1), (1, 2, 2, 1), "VALID") * 0.25
        for _ in range(no_convs_per_block):
            w, b = params[idx]
            idx += 1
            dn = lax.conv_dimension_numbers(x.shape, w.shape,
                                            ("NHWC", "HWIO", "NHWC"))
            x = lax.conv_general_dilated(x, w, (1, 1), "SAME",
                                         dimension_numbers=dn)
            x = jnp.maximum(x + b, 0.0)
    return jnp.transpose(x, (0, 3, 1, 2))


# ---------------------------------- main ------------------------------------ #

if __name__ == "__main__":
    # Encoder(input_channels=4, num_filters=[[8],[16]], no_convs_per_block=2,
    #         initializers=None, padding=True, posterior=False)
    input_channels = 4
    num_filters = [[8], [16]]
    no_convs_per_block = 2

    key = jax.random.PRNGKey(0)
    key, kx, kp = jax.random.split(key, 3)
    x = jax.random.normal(kx, (2, input_channels, 16, 16), jnp.float32)  # NCHW

    params = init_encoder_params(kp, input_channels, num_filters,
                                 no_convs_per_block)

    out = encoder_forward(x, params, num_filters, no_convs_per_block)
    out = jax.block_until_ready(out)

    ref = encoder_forward_ref(x, params, num_filters, no_convs_per_block)
    assert out.shape == (2, num_filters[-1][0], 8, 8), out.shape
    # bf16 MXU operands with f32 accumulation; error is << 1e-2 at these scales.
    assert jnp.allclose(out, ref, atol=1e-2, rtol=1e-2), float(
        jnp.max(jnp.abs(out - ref)))

    print("KERNEL_OK")
</pallas_src>

<mosaic_0001>
module attributes {stable_mosaic.version = 11 : i64} {
  func.func @kernel(%arg0: i32, %arg1: memref<16x128xf32, #tpu.memory_space<vmem>>, %arg2: memref<4x3x256x256xbf16, #tpu.memory_space<vmem>>, %arg3: memref<4x256xf32, #tpu.memory_space<vmem>>, %arg4: memref<8x16xf32, #tpu.memory_space<vmem>>, %arg5: memref<256x128xf32, #tpu.memory_space<vmem>>, %arg6: memref<8x256xf32, #tpu.memory_space<vmem>>, %arg7: memref<32x256xbf16, #tpu.memory_space<vmem>>) attributes {dimension_semantics = [#tpu.dimension_semantics<arbitrary>], iteration_bounds = array<i64: 1>, scalar_prefetch = 0 : i64, scratch_operands = 1 : i64, tpu.core_type = #tpu.core_type<tc>, window_params = [{pipeline_mode = #tpu.pipeline_mode<synchronous>, transform_indices = @transform_0, window_bounds = array<i64: 16, 128>}, {pipeline_mode = #tpu.pipeline_mode<synchronous>, transform_indices = @transform_1, window_bounds = array<i64: 4, 3, 256, 256>}, {pipeline_mode = #tpu.pipeline_mode<synchronous>, transform_indices = @transform_2, window_bounds = array<i64: 4, 256>}, {pipeline_mode = #tpu.pipeline_mode<synchronous>, transform_indices = @transform_3, window_bounds = array<i64: 8, 16>}, {pipeline_mode = #tpu.pipeline_mode<synchronous>, transform_indices = @transform_4, window_bounds = array<i64: 256, 128>}, {pipeline_mode = #tpu.pipeline_mode<synchronous>, transform_indices = @transform_5, window_bounds = array<i64: 8, 256>}]} {
    %c0 = arith.constant 0 : index
    %c0_0 = arith.constant 0 : index
    %0 = vector.load %arg1[%c0, %c0_0] : memref<16x128xf32, #tpu.memory_space<vmem>>, vector<16x128xf32>
    %cst = arith.constant 0.000000e+00 : bf16
    %1 = vector.broadcast %cst : bf16 to vector<1x128xbf16>
    %c0_1 = arith.constant 0 : index
    %c0_2 = arith.constant 0 : index
    %2 = vector.load %arg7[%c0_1, %c0_2] : memref<32x256xbf16, #tpu.memory_space<vmem>>, vector<1x128xbf16>
    tpu.vector_store %arg7[%c0_1, %c0_2], %1 {strides = array<i32>} : memref<32x256xbf16, #tpu.memory_space<vmem>>, vector<1x128xbf16>,
    %c17 = arith.constant 17 : index
    %c0_3 = arith.constant 0 : index
    %3 = vector.load %arg7[%c17, %c0_3] : memref<32x256xbf16, #tpu.memory_space<vmem>>, vector<1x128xbf16>
    tpu.vector_store %arg7[%c17, %c0_3], %1 {strides = array<i32>} : memref<32x256xbf16, #tpu.memory_space<vmem>>, vector<1x128xbf16>,
    %4 = arith.truncf %0 : vector<16x128xf32> to vector<16x128xbf16>
    %c1 = arith.constant 1 : index
    %c0_4 = arith.constant 0 : index
    %5 = vector.load %arg7[%c1, %c0_4] : memref<32x256xbf16, #tpu.memory_space<vmem>>, vector<16x128xbf16>
    tpu.vector_store %arg7[%c1, %c0_4], %4 {strides = array<i32>} : memref<32x256xbf16, #tpu.memory_space<vmem>>, vector<16x128xbf16>,
    %cst_5 = arith.constant 0.000000e+00 : f32
    %6 = vector.broadcast %cst_5 : f32 to vector<16x256xf32>
    %c0_6 = arith.constant 0 : index
    %c0_7 = arith.constant 0 : index
    %7 = vector.load %arg7[%c0_6, %c0_7] : memref<32x256xbf16, #tpu.memory_space<vmem>>, vector<16x128xbf16>
    %c0_8 = arith.constant 0 : index
    %c0_9 = arith.constant 0 : index
    %c0_10 = arith.constant 0 : index
    %c0_11 = arith.constant 0 : index
    %8 = vector.load %arg2[%c0_8, %c0_9, %c0_10, %c0_11] : memref<4x3x256x256xbf16, #tpu.memory_space<vmem>>, vector<1x1x128x256xbf16>
    %9 = vector.shape_cast %8 : vector<1x1x128x256xbf16> to vector<128x256xbf16>
    %cst_12 = arith.constant dense<0.000000e+00> : vector<16x256xf32>
    %10 = tpu.matmul %7, %9, %cst_12 {dimension_numbers = #tpu.dot_dimension_numbers<[1], [0], [0], [1], [0, 0, 1, 1], [], []>} : vector<16x128xbf16>, vector<128x256xbf16>, vector<16x256xf32> -> vector<16x256xf32>
    %11 = arith.addf %6, %10 : vector<16x256xf32>
    %c1_13 = arith.constant 1 : index
    %c0_14 = arith.constant 0 : index
    %12 = vector.load %arg7[%c1_13, %c0_14] : memref<32x256xbf16, #tpu.memory_space<vmem>>, vector<16x128xbf16>
    %c0_15 = arith.constant 0 : index
    %c1_16 = arith.constant 1 : index
    %c0_17 = arith.constant 0 : index
    %c0_18 = arith.constant 0 : index
    %13 = vector.load %arg2[%c0_15, %c1_16, %c0_17, %c0_18] : memref<4x3x256x256xbf16, #tpu.memory_space<vmem>>, vector<1x1x128x256xbf16>
    %14 = vector.shape_cast %13 : vector<1x1x128x256xbf16> to vector<128x256xbf16>
    %cst_19 = arith.constant dense<0.000000e+00> : vector<16x256xf32>
    %15 = tpu.matmul %12, %14, %cst_19 {dimension_numbers = #tpu.dot_dimension_numbers<[1], [0], [0], [1], [0, 0, 1, 1], [], []>} : vector<16x128xbf16>, vector<128x256xbf16>, vector<16x256xf32> -> vector<16x256xf32>
    %16 = arith.addf %11, %15 : vector<16x256xf32>
    %c2 = arith.constant 2 : index
    %c0_20 = arith.constant 0 : index
    %17 = vector.load %arg7[%c2, %c0_20] : memref<32x256xbf16, #tpu.memory_space<vmem>>, vector<16x128xbf16>
    %c0_21 = arith.constant 0 : index
    %c2_22 = arith.constant 2 : index
    %c0_23 = arith.constant 0 : index
    %c0_24 = arith.constant 0 : index
    %18 = vector.load %arg2[%c0_21, %c2_22, %c0_23, %c0_24] : memref<4x3x256x256xbf16, #tpu.memory_space<vmem>>, vector<1x1x128x256xbf16>
    %19 = vector.shape_cast %18 : vector<1x1x128x256xbf16> to vector<128x256xbf16>
    %cst_25 = arith.constant dense<0.000000e+00> : vector<16x256xf32>
    %20 = tpu.matmul %17, %19, %cst_25 {dimension_numbers = #tpu.dot_dimension_numbers<[1], [0], [0], [1], [0, 0, 1, 1], [], []>} : vector<16x128xbf16>, vector<128x256xbf16>, vector<16x256xf32> -> vector<16x256xf32>
    %21 = arith.addf %16, %20 : vector<16x256xf32>
    %c0_26 = arith.constant 0 : index
    %c0_27 = arith.constant 0 : index
    %22 = vector.load %arg3[%c0_26, %c0_27] : memref<4x256xf32, #tpu.memory_space<vmem>>, vector<1x256xf32>
    %23 = vector.broadcast %22 : vector<1x256xf32> to vector<16x256xf32>
    %24 = arith.addf %21, %23 : vector<16x256xf32>
    %cst_28 = arith.constant 0.000000e+00 : f32
    %25 = vector.broadcast %cst_28 : f32 to vector<16x256xf32>
    %26 = arith.maximumf %24, %25 : vector<16x256xf32>
    %cst_29 = arith.constant 0.000000e+00 : bf16
    %27 = vector.broadcast %cst_29 : bf16 to vector<1x256xbf16>
    %c0_30 = arith.constant 0 : index
    %c0_31 = arith.constant 0 : index
    %28 = vector.load %arg7[%c0_30, %c0_31] : memref<32x256xbf16, #tpu.memory_space<vmem>>, vector<1x256xbf16>
    tpu.vector_store %arg7[%c0_30, %c0_31], %27 {strides = array<i32>} : memref<32x256xbf16, #tpu.memory_space<vmem>>, vector<1x256xbf16>,
    %c17_32 = arith.constant 17 : index
    %c0_33 = arith.constant 0 : index
    %29 = vector.load %arg7[%c17_32, %c0_33] : memref<32x256xbf16, #tpu.memory_space<vmem>>, vector<1x256xbf16>
    tpu.vector_store %arg7[%c17_32, %c0_33], %27 {strides = array<i32>} : memref<32x256xbf16, #tpu.memory_space<vmem>>, vector<1x256xbf16>,
    %30 = arith.truncf %26 : vector<16x256xf32> to vector<16x256xbf16>
    %c1_34 = arith.constant 1 : index
    %c0_35 = arith.constant 0 : index
    %31 = vector.load %arg7[%c1_34, %c0_35] : memref<32x256xbf16, #tpu.memory_space<vmem>>, vector<16x256xbf16>
    tpu.vector_store %arg7[%c1_34, %c0_35], %30 {strides = array<i32>} : memref<32x256xbf16, #tpu.memory_space<vmem>>, vector<16x256xbf16>,
    %cst_36 = arith.constant 0.000000e+00 : f32
    %32 = vector.broadcast %cst_36 : f32 to vector<16x256xf32>
    %c0_37 = arith.constant 0 : index
    %c0_38 = arith.constant 0 : index
    %33 = vector.load %arg7[%c0_37, %c0_38] : memref<32x256xbf16, #tpu.memory_space<vmem>>, vector<16x256xbf16>
    %c1_39 = arith.constant 1 : index
    %c0_40 = arith.constant 0 : index
    %c0_41 = arith.constant 0 : index
    %c0_42 = arith.constant 0 : index
    %34 = vector.load %arg2[%c1_39, %c0_40, %c0_41, %c0_42] : memref<4x3x256x256xbf16, #tpu.memory_space<vmem>>, vector<1x1x256x256xbf16>
    %35 = vector.shape_cast %34 : vector<1x1x256x256xbf16> to vector<256x256xbf16>
    %cst_43 = arith.constant dense<0.000000e+00> : vector<16x256xf32>
    %36 = tpu.matmul %33, %35, %cst_43 {dimension_numbers = #tpu.dot_dimension_numbers<[1], [0], [0], [1], [0, 0, 1, 1], [], []>} : vector<16x256xbf16>, vector<256x256xbf16>, vector<16x256xf32> -> vector<16x256xf32>
    %37 = arith.addf %32, %36 : vector<16x256xf32>
    %c1_44 = arith.constant 1 : index
    %c0_45 = arith.constant 0 : index
    %38 = vector.load %arg7[%c1_44, %c0_45] : memref<32x256xbf16, #tpu.memory_space<vmem>>, vector<16x256xbf16>
    %c1_46 = arith.constant 1 : index
    %c1_47 = arith.constant 1 : index
    %c0_48 = arith.constant 0 : index
    %c0_49 = arith.constant 0 : index
    %39 = vector.load %arg2[%c1_46, %c1_47, %c0_48, %c0_49] : memref<4x3x256x256xbf16, #tpu.memory_space<vmem>>, vector<1x1x256x256xbf16>
    %40 = vector.shape_cast %39 : vector<1x1x256x256xbf16> to vector<256x256xbf16>
    %cst_50 = arith.constant dense<0.000000e+00> : vector<16x256xf32>
    %41 = tpu.matmul %38, %40, %cst_50 {dimension_numbers = #tpu.dot_dimension_numbers<[1], [0], [0], [1], [0, 0, 1, 1], [], []>} : vector<16x256xbf16>, vector<256x256xbf16>, vector<16x256xf32> -> vector<16x256xf32>
    %42 = arith.addf %37, %41 : vector<16x256xf32>
    %c2_51 = arith.constant 2 : index
    %c0_52 = arith.constant 0 : index
    %43 = vector.load %arg7[%c2_51, %c0_52] : memref<32x256xbf16, #tpu.memory_space<vmem>>, vector<16x256xbf16>
    %c1_53 = arith.constant 1 : index
    %c2_54 = arith.constant 2 : index
    %c0_55 = arith.constant 0 : index
    %c0_56 = arith.constant 0 : index
    %44 = vector.load %arg2[%c1_53, %c2_54, %c0_55, %c0_56] : memref<4x3x256x256xbf16, #tpu.memory_space<vmem>>, vector<1x1x256x256xbf16>
    %45 = vector.shape_cast %44 : vector<1x1x256x256xbf16> to vector<256x256xbf16>
    %cst_57 = arith.constant dense<0.000000e+00> : vector<16x256xf32>
    %46 = tpu.matmul %43, %45, %cst_57 {dimension_numbers = #tpu.dot_dimension_numbers<[1], [0], [0], [1], [0, 0, 1, 1], [], []>} : vector<16x256xbf16>, vector<256x256xbf16>, vector<16x256xf32> -> vector<16x256xf32>
    %47 = arith.addf %42, %46 : vector<16x256xf32>
    %c1_58 = arith.constant 1 : index
    %c0_59 = arith.constant 0 : index
    %48 = vector.load %arg3[%c1_58, %c0_59] : memref<4x256xf32, #tpu.memory_space<vmem>>, vector<1x256xf32>
    %49 = vector.broadcast %48 : vector<1x256xf32> to vector<16x256xf32>
    %50 = arith.addf %47, %49 : vector<16x256xf32>
    %cst_60 = arith.constant 0.000000e+00 : f32
    %51 = vector.broadcast %cst_60 : f32 to vector<16x256xf32>
    %52 = arith.maximumf %50, %51 : vector<16x256xf32>
    %c0_61 = arith.constant 0 : index
    %c0_62 = arith.constant 0 : index
    %53 = vector.load %arg4[%c0_61, %c0_62] : memref<8x16xf32, #tpu.memory_space<vmem>>, vector<8x16xf32>
    %c0_63 = arith.constant 0 : index
    %c0_64 = arith.constant 0 : index
    %54 = vector.load %arg5[%c0_63, %c0_64] : memref<256x128xf32, #tpu.memory_space<vmem>>, vector<256x128xf32>
    %cst_65 = arith.constant dense<0.000000e+00> : vector<8x256xf32>
    %55 = tpu.matmul %53, %52, %cst_65 {dimension_numbers = #tpu.dot_dimension_numbers<[1], [0], [0], [1], [0, 0, 1, 1], [], []>} : vector<8x16xf32>, vector<16x256xf32>, vector<8x256xf32> -> vector<8x256xf32>
    %cst_66 = arith.constant dense<0.000000e+00> : vector<8x128xf32>
    %56 = tpu.matmul %55, %54, %cst_66 {dimension_numbers = #tpu.dot_dimension_numbers<[1], [0], [0], [1], [0, 0, 1, 1], [], []>} : vector<8x256xf32>, vector<256x128xf32>, vector<8x128xf32> -> vector<8x128xf32>
    %cst_67 = arith.constant 0.000000e+00 : bf16
    %57 = vector.broadcast %cst_67 : bf16 to vector<1x128xbf16>
    %c0_68 = arith.constant 0 : index
    %c0_69 = arith.constant 0 : index
    %58 = vector.load %arg7[%c0_68, %c0_69] : memref<32x256xbf16, #tpu.memory_space<vmem>>, vector<1x128xbf16>
    tpu.vector_store %arg7[%c0_68, %c0_69], %57 {strides = array<i32>} : memref<32x256xbf16, #tpu.memory_space<vmem>>, vector<1x128xbf16>,
    %c9 = arith.constant 9 : index
    %c0_70 = arith.constant 0 : index
    %59 = vector.load %arg7[%c9, %c0_70] : memref<32x256xbf16, #tpu.memory_space<vmem>>, vector<1x128xbf16>
    tpu.vector_store %arg7[%c9, %c0_70], %57 {strides = array<i32>} : memref<32x256xbf16, #tpu.memory_space<vmem>>, vector<1x128xbf16>,
    %60 = arith.truncf %56 : vector<8x128xf32> to vector<8x128xbf16>
    %c1_71 = arith.constant 1 : index
    %c0_72 = arith.constant 0 : index
    %61 = vector.load %arg7[%c1_71, %c0_72] : memref<32x256xbf16, #tpu.memory_space<vmem>>, vector<8x128xbf16>
    tpu.vector_store %arg7[%c1_71, %c0_72], %60 {strides = array<i32>} : memref<32x256xbf16, #tpu.memory_space<vmem>>, vector<8x128xbf16>,
    %cst_73 = arith.constant 0.000000e+00 : f32
    %62 = vector.broadcast %cst_73 : f32 to vector<8x256xf32>
    %c0_74 = arith.constant 0 : index
    %c0_75 = arith.constant 0 : index
    %63 = vector.load %arg7[%c0_74, %c0_75] : memref<32x256xbf16, #tpu.memory_space<vmem>>, vector<8x128xbf16>
    %c2_76 = arith.constant 2 : index
    %c0_77 = arith.constant 0 : index
    %c0_78 = arith.constant 0 : index
    %c0_79 = arith.constant 0 : index
    %64 = vector.load %arg2[%c2_76, %c0_77, %c0_78, %c0_79] : memref<4x3x256x256xbf16, #tpu.memory_space<vmem>>, vector<1x1x128x256xbf16>
    %65 = vector.shape_cast %64 : vector<1x1x128x256xbf16> to vector<128x256xbf16>
    %cst_80 = arith.constant dense<0.000000e+00> : vector<8x256xf32>
    %66 = tpu.matmul %63, %65, %cst_80 {dimension_numbers = #tpu.dot_dimension_numbers<[1], [0], [0], [1], [0, 0, 1, 1], [], []>} : vector<8x128xbf16>, vector<128x256xbf16>, vector<8x256xf32> -> vector<8x256xf32>
    %67 = arith.addf %62, %66 : vector<8x256xf32>
    %c1_81 = arith.constant 1 : index
    %c0_82 = arith.constant 0 : index
    %68 = vector.load %arg7[%c1_81, %c0_82] : memref<32x256xbf16, #tpu.memory_space<vmem>>, vector<8x128xbf16>
    %c2_83 = arith.constant 2 : index
    %c1_84 = arith.constant 1 : index
    %c0_85 = arith.constant 0 : index
    %c0_86 = arith.constant 0 : index
    %69 = vector.load %arg2[%c2_83, %c1_84, %c0_85, %c0_86] : memref<4x3x256x256xbf16, #tpu.memory_space<vmem>>, vector<1x1x128x256xbf16>
    %70 = vector.shape_cast %69 : vector<1x1x128x256xbf16> to vector<128x256xbf16>
    %cst_87 = arith.constant dense<0.000000e+00> : vector<8x256xf32>
    %71 = tpu.matmul %68, %70, %cst_87 {dimension_numbers = #tpu.dot_dimension_numbers<[1], [0], [0], [1], [0, 0, 1, 1], [], []>} : vector<8x128xbf16>, vector<128x256xbf16>, vector<8x256xf32> -> vector<8x256xf32>
    %72 = arith.addf %67, %71 : vector<8x256xf32>
    %c2_88 = arith.constant 2 : index
    %c0_89 = arith.constant 0 : index
    %73 = vector.load %arg7[%c2_88, %c0_89] : memref<32x256xbf16, #tpu.memory_space<vmem>>, vector<8x128xbf16>
    %c2_90 = arith.constant 2 : index
    %c2_91 = arith.constant 2 : index
    %c0_92 = arith.constant 0 : index
    %c0_93 = arith.constant 0 : index
    %74 = vector.load %arg2[%c2_90, %c2_91, %c0_92, %c0_93] : memref<4x3x256x256xbf16, #tpu.memory_space<vmem>>, vector<1x1x128x256xbf16>
    %75 = vector.shape_cast %74 : vector<1x1x128x256xbf16> to vector<128x256xbf16>
    %cst_94 = arith.constant dense<0.000000e+00> : vector<8x256xf32>
    %76 = tpu.matmul %73, %75, %cst_94 {dimension_numbers = #tpu.dot_dimension_numbers<[1], [0], [0], [1], [0, 0, 1, 1], [], []>} : vector<8x128xbf16>, vector<128x256xbf16>, vector<8x256xf32> -> vector<8x256xf32>
    %77 = arith.addf %72, %76 : vector<8x256xf32>
    %c2_95 = arith.constant 2 : index
    %c0_96 = arith.constant 0 : index
    %78 = vector.load %arg3[%c2_95, %c0_96] : memref<4x256xf32, #tpu.memory_space<vmem>>, vector<1x256xf32>
    %79 = vector.broadcast %78 : vector<1x256xf32> to vector<8x256xf32>
    %80 = arith.addf %77, %79 : vector<8x256xf32>
    %cst_97 = arith.constant 0.000000e+00 : f32
    %81 = vector.broadcast %cst_97 : f32 to vector<8x256xf32>
    %82 = arith.maximumf %80, %81 : vector<8x256xf32>
    %cst_98 = arith.constant 0.000000e+00 : bf16
    %83 = vector.broadcast %cst_98 : bf16 to vector<1x256xbf16>
    %c0_99 = arith.constant 0 : index
    %c0_100 = arith.constant 0 : index
    %84 = vector.load %arg7[%c0_99, %c0_100] : memref<32x256xbf16, #tpu.memory_space<vmem>>, vector<1x256xbf16>
    tpu.vector_store %arg7[%c0_99, %c0_100], %83 {strides = array<i32>} : memref<32x256xbf16, #tpu.memory_space<vmem>>, vector<1x256xbf16>,
    %c9_101 = arith.constant 9 : index
    %c0_102 = arith.constant 0 : index
    %85 = vector.load %arg7[%c9_101, %c0_102] : memref<32x256xbf16, #tpu.memory_space<vmem>>, vector<1x256xbf16>
    tpu.vector_store %arg7[%c9_101, %c0_102], %83 {strides = array<i32>} : memref<32x256xbf16, #tpu.memory_space<vmem>>, vector<1x256xbf16>,
    %86 = arith.truncf %82 : vector<8x256xf32> to vector<8x256xbf16>
    %c1_103 = arith.constant 1 : index
    %c0_104 = arith.constant 0 : index
    %87 = vector.load %arg7[%c1_103, %c0_104] : memref<32x256xbf16, #tpu.memory_space<vmem>>, vector<8x256xbf16>
    tpu.vector_store %arg7[%c1_103, %c0_104], %86 {strides = array<i32>} : memref<32x256xbf16, #tpu.memory_space<vmem>>, vector<8x256xbf16>,
    %cst_105 = arith.constant 0.000000e+00 : f32
    %88 = vector.broadcast %cst_105 : f32 to vector<8x256xf32>
    %c0_106 = arith.constant 0 : index
    %c0_107 = arith.constant 0 : index
    %89 = vector.load %arg7[%c0_106, %c0_107] : memref<32x256xbf16, #tpu.memory_space<vmem>>, vector<8x256xbf16>
    %c3 = arith.constant 3 : index
    %c0_108 = arith.constant 0 : index
    %c0_109 = arith.constant 0 : index
    %c0_110 = arith.constant 0 : index
    %90 = vector.load %arg2[%c3, %c0_108, %c0_109, %c0_110] : memref<4x3x256x256xbf16, #tpu.memory_space<vmem>>, vector<1x1x256x256xbf16>
    %91 = vector.shape_cast %90 : vector<1x1x256x256xbf16> to vector<256x256xbf16>
    %cst_111 = arith.constant dense<0.000000e+00> : vector<8x256xf32>
    %92 = tpu.matmul %89, %91, %cst_111 {dimension_numbers = #tpu.dot_dimension_numbers<[1], [0], [0], [1], [0, 0, 1, 1], [], []>} : vector<8x256xbf16>, vector<256x256xbf16>, vector<8x256xf32> -> vector<8x256xf32>
    %93 = arith.addf %88, %92 : vector<8x256xf32>
    %c1_112 = arith.constant 1 : index
    %c0_113 = arith.constant 0 : index
    %94 = vector.load %arg7[%c1_112, %c0_113] : memref<32x256xbf16, #tpu.memory_space<vmem>>, vector<8x256xbf16>
    %c3_114 = arith.constant 3 : index
    %c1_115 = arith.constant 1 : index
    %c0_116 = arith.constant 0 : index
    %c0_117 = arith.constant 0 : index
    %95 = vector.load %arg2[%c3_114, %c1_115, %c0_116, %c0_117] : memref<4x3x256x256xbf16, #tpu.memory_space<vmem>>, vector<1x1x256x256xbf16>
    %96 = vector.shape_cast %95 : vector<1x1x256x256xbf16> to vector<256x256xbf16>
    %cst_118 = arith.constant dense<0.000000e+00> : vector<8x256xf32>
    %97 = tpu.matmul %94, %96, %cst_118 {dimension_numbers = #tpu.dot_dimension_numbers<[1], [0], [0], [1], [0, 0, 1, 1], [], []>} : vector<8x256xbf16>, vector<256x256xbf16>, vector<8x256xf32> -> vector<8x256xf32>
    %98 = arith.addf %93, %97 : vector<8x256xf32>
    %c2_119 = arith.constant 2 : index
    %c0_120 = arith.constant 0 : index
    %99 = vector.load %arg7[%c2_119, %c0_120] : memref<32x256xbf16, #tpu.memory_space<vmem>>, vector<8x256xbf16>
    %c3_121 = arith.constant 3 : index
    %c2_122 = arith.constant 2 : index
    %c0_123 = arith.constant 0 : index
    %c0_124 = arith.constant 0 : index
    %100 = vector.load %arg2[%c3_121, %c2_122, %c0_123, %c0_124] : memref<4x3x256x256xbf16, #tpu.memory_space<vmem>>, vector<1x1x256x256xbf16>
    %101 = vector.shape_cast %100 : vector<1x1x256x256xbf16> to vector<256x256xbf16>
    %cst_125 = arith.constant dense<0.000000e+00> : vector<8x256xf32>
    %102 = tpu.matmul %99, %101, %cst_125 {dimension_numbers = #tpu.dot_dimension_numbers<[1], [0], [0], [1], [0, 0, 1, 1], [], []>} : vector<8x256xbf16>, vector<256x256xbf16>, vector<8x256xf32> -> vector<8x256xf32>
    %103 = arith.addf %98, %102 : vector<8x256xf32>
    %c3_126 = arith.constant 3 : index
    %c0_127 = arith.constant 0 : index
    %104 = vector.load %arg3[%c3_126, %c0_127] : memref<4x256xf32, #tpu.memory_space<vmem>>, vector<1x256xf32>
    %105 = vector.broadcast %104 : vector<1x256xf32> to vector<8x256xf32>
    %106 = arith.addf %103, %105 : vector<8x256xf32>
    %cst_128 = arith.constant 0.000000e+00 : f32
    %107 = vector.broadcast %cst_128 : f32 to vector<8x256xf32>
    %108 = arith.maximumf %106, %107 : vector<8x256xf32>
    %c0_129 = arith.constant 0 : index
    %c0_130 = arith.constant 0 : index
    %109 = vector.load %arg6[%c0_129, %c0_130] : memref<8x256xf32, #tpu.memory_space<vmem>>, vector<8x256xf32>
    tpu.vector_store %arg6[%c0_129, %c0_130], %108 {strides = array<i32>} : memref<8x256xf32, #tpu.memory_space<vmem>>, vector<8x256xf32>,
    return
  }
  func.func @transform_0(%arg0: i32) -> (i32, i32) {
    %c0_i32 = arith.constant 0 : i32
    %c0_i32_0 = arith.constant 0 : i32
    %c0_i32_1 = arith.constant 0 : i32
    return %c0_i32, %c0_i32_0 : i32, i32
  }
  func.func @transform_1(%arg0: i32) -> (i32, i32, i32, i32) {
    %c0_i32 = arith.constant 0 : i32
    %c0_i32_0 = arith.constant 0 : i32
    %c0_i32_1 = arith.constant 0 : i32
    %c0_i32_2 = arith.constant 0 : i32
    %c0_i32_3 = arith.constant 0 : i32
    return %c0_i32, %c0_i32_0, %c0_i32_1, %c0_i32_2 : i32, i32, i32, i32
  }
  func.func @transform_2(%arg0: i32) -> (i32, i32) {
    %c0_i32 = arith.constant 0 : i32
    %c0_i32_0 = arith.constant 0 : i32
    %c0_i32_1 = arith.constant 0 : i32
    return %c0_i32, %c0_i32_0 : i32, i32
  }
  func.func @transform_3(%arg0: i32) -> (i32, i32) {
    %c0_i32 = arith.constant 0 : i32
    %c0_i32_0 = arith.constant 0 : i32
    %c0_i32_1 = arith.constant 0 : i32
    return %c0_i32, %c0_i32_0 : i32, i32
  }
  func.func @transform_4(%arg0: i32) -> (i32, i32) {
    %c0_i32 = arith.constant 0 : i32
    %c0_i32_0 = arith.constant 0 : i32
    %c0_i32_1 = arith.constant 0 : i32
    return %c0_i32, %c0_i32_0 : i32, i32
  }
  func.func @transform_5(%arg0: i32) -> (i32, i32) {
    %c0_i32 = arith.constant 0 : i32
    %c0_i32_0 = arith.constant 0 : i32
    %c0_i32_1 = arith.constant 0 : i32
    return %c0_i32, %c0_i32_0 : i32, i32
  }
}

</mosaic_0001>

<llo_original>
// kernel: tpu_custom_call.1
$region0: #{tpu_custom_call.1}
  #allocation0 [shape = 'u32[]', space=smem, size = 0x4, offset = 0x4, fixed_abs, tag = 'smem constant byte address 0x4 - core index']
  #allocation1 [shape = 'u32[144,128]{1,0:T(1,128)}', space=vmem, size = 0x12000, scoped, tag = 'internal scratch']
  #allocation2 [shape = 'bf16[32,256]{1,0:T(16,128)(2,1)}', space=vmem, size = 0x4000, scoped, tag = 'scratch operand']
  %s0 = inlined_call_operand.hbm [shape: f32[16,128], index: 0, kind: input, shape index: {}]
  %s1 = inlined_call_operand.hbm [shape: bf16[4,3,256,256], index: 1, kind: input, shape index: {}]
  %s2 = inlined_call_operand.hbm [shape: f32[4,256], index: 2, kind: input, shape index: {}]
  %s3 = inlined_call_operand.hbm [shape: f32[8,16], index: 3, kind: input, shape index: {}]
  %s4 = inlined_call_operand.hbm [shape: f32[256,128], index: 4, kind: input, shape index: {}]
  %s5 = inlined_call_operand.hbm [shape: f32[8,256], index: 5, kind: output, shape index: {}]
  %s6 = sld [smem:[#allocation0]]
  $region50: #{tpu_custom_call.1} parent=0
    _
  %s8 = ssub.s32 1, %s6
  %s9 = scalar_select 0, %s8, %s6
  $region1: #{tpu_custom_call.1} parent=0
    #allocation3 [shape = 'u8[8192]{0}', space=vmem, size = 0x2000, scoped, tag = 'input window, operand 0, single buffered']
    #allocation4 [shape = 's32[1]{0}', space=sflag, size = 0x4, scoped, tag = 'scoped memory for tpu_custom_call.1']
    #allocation5 [shape = 's32[1]{0}', space=sflag, size = 0x4, scoped, tag = 'scoped memory for tpu_custom_call.1']
    #allocation6 [shape = 'u8[1572864]{0}', space=vmem, size = 0x180000, scoped, tag = 'input window, operand 1, single buffered']
    #allocation7 [shape = 's32[1]{0}', space=sflag, size = 0x4, scoped, tag = 'scoped memory for tpu_custom_call.1']
    #allocation8 [shape = 'u8[4096]{0}', space=vmem, size = 0x1000, scoped, tag = 'input window, operand 2, single buffered']
    #allocation9 [shape = 'u8[4096]{0}', space=vmem, size = 0x1000, scoped, tag = 'input window, operand 3, single buffered']
    #allocation10 [shape = 's32[1]{0}', space=sflag, size = 0x4, scoped, tag = 'scoped memory for tpu_custom_call.1']
    #allocation11 [shape = 'u8[131072]{0}', space=vmem, size = 0x20000, scoped, tag = 'input window, operand 4, single buffered']
    #allocation12 [shape = 'u8[8192]{0}', space=vmem, size = 0x2000, scoped, tag = 'output window, operand 0, single buffered']
    %10 = vsyncpa [#allocation4], 0
    %11 = vsyncpa [#allocation7], 0
    %12 = vsyncpa [#allocation10], 0
    %13 = vsyncpa [#allocation5], 0
    // Predicated region
    $region2: #{tpu_custom_call.1} parent=1 // pred_check
      _
    $region3: #{tpu_custom_call.1} parent=1 // pred_check_branch
      %15 = sbr.rel (0) target = $region5
    $region4: #{tpu_custom_call.1} parent=1 // pred_region
      %s17 = ssub.s32 256, 256
      %18 = vsyncadd [#allocation4], %s17
      %s19 = sshll.u32 [#allocation3], 4
      %s20 = int_to_ptr.vmem [resolvable:$true] %s19
      %25 = dma.hbm_to_vmem [thread:$0]  %s0, 256, %s20, [#allocation4], 128, 128, 8
    $region5: #{tpu_custom_call.1} parent=1 // pred_fallthru
      _
    // Predicated region
    $region6: #{tpu_custom_call.1} parent=1 // pred_check
      _
    $region7: #{tpu_custom_call.1} parent=1 // pred_check_branch
      %27 = sbr.rel (0) target = $region9
    $region8: #{tpu_custom_call.1} parent=1 // pred_region
      %s29 = ssub.s32 49152, 49152
      %30 = vsyncadd [#allocation7], %s29
      %s31 = sshll.u32 [#allocation6], 4
      %s32 = int_to_ptr.vmem [resolvable:$true] %s31
      %37 = dma.hbm_to_vmem [thread:$0]  %s1, 49152, %s32, [#allocation7], 128, 128, 8
    $region9: #{tpu_custom_call.1} parent=1 // pred_fallthru
      _
    // Predicated region
    $region10: #{tpu_custom_call.1} parent=1 // pred_check
      _
    $region11: #{tpu_custom_call.1} parent=1 // pred_check_branch
      %39 = sbr.rel (0) target = $region13
    $region12: #{tpu_custom_call.1} parent=1 // pred_region
      %s41 = ssub.s32 128, 128
      %42 = vsyncadd [#allocation7], %s41
      %s44 = sshll.u32 [#allocation8], 4
      %s45 = int_to_ptr.vmem [resolvable:$true] %s44
      %47 = dma.hbm_to_vmem [thread:$0]  %s2, 128, %s45, [#allocation7]
    $region13: #{tpu_custom_call.1} parent=1 // pred_fallthru
      _
    // Predicated region
    $region14: #{tpu_custom_call.1} parent=1 // pred_check
      _
    $region15: #{tpu_custom_call.1} parent=1 // pred_check_branch
      %49 = sbr.rel (0) target = $region17
    $region16: #{tpu_custom_call.1} parent=1 // pred_region
      %s51 = ssub.s32 128, 128
      %52 = vsyncadd [#allocation10], %s51
      %s54 = sshll.u32 [#allocation9], 4
      %s55 = int_to_ptr.vmem [resolvable:$true] %s54
      %57 = dma.hbm_to_vmem [thread:$0]  %s3, 128, %s55, [#allocation10]
    $region17: #{tpu_custom_call.1} parent=1 // pred_fallthru
      _
    // Predicated region
    $region18: #{tpu_custom_call.1} parent=1 // pred_check
      _
    $region19: #{tpu_custom_call.1} parent=1 // pred_check_branch
      %59 = sbr.rel (0) target = $region21
    $region20: #{tpu_custom_call.1} parent=1 // pred_region
      %s61 = ssub.s32 4096, 4096
      %62 = vsyncadd [#allocation10], %s61
      %s63 = sshll.u32 [#allocation11], 4
      %s64 = int_to_ptr.vmem [resolvable:$true] %s63
      %69 = dma.hbm_to_vmem [thread:$0]  %s4, 4096, %s64, [#allocation10], 128, 128, 8
    $region21: #{tpu_custom_call.1} parent=1 // pred_fallthru
      _
    // Predicated region
    $region22: #{tpu_custom_call.1} parent=1 // pred_check
      _
    $region23: #{tpu_custom_call.1} parent=1 // pred_check_branch
      %71 = sbr.rel (0) target = $region25
    $region24: #{tpu_custom_call.1} parent=1 // pred_region
      %72 = dma.done [#allocation4], 256
    $region25: #{tpu_custom_call.1} parent=1 // pred_fallthru
      _
    // Predicated region
    $region26: #{tpu_custom_call.1} parent=1 // pred_check
      _
    $region27: #{tpu_custom_call.1} parent=1 // pred_check_branch
      %74 = sbr.rel (0) target = $region29
    $region28: #{tpu_custom_call.1} parent=1 // pred_region
      %75 = dma.done [#allocation7], 49152
    $region29: #{tpu_custom_call.1} parent=1 // pred_fallthru
      _
    // Predicated region
    $region30: #{tpu_custom_call.1} parent=1 // pred_check
      _
    $region31: #{tpu_custom_call.1} parent=1 // pred_check_branch
      %77 = sbr.rel (0) target = $region33
    $region32: #{tpu_custom_call.1} parent=1 // pred_region
      %78 = dma.done [#allocation7], 128
    $region33: #{tpu_custom_call.1} parent=1 // pred_fallthru
      _
    // Predicated region
    $region34: #{tpu_custom_call.1} parent=1 // pred_check
      _
    $region35: #{tpu_custom_call.1} parent=1 // pred_check_branch
      %80 = sbr.rel (0) target = $region37
    $region36: #{tpu_custom_call.1} parent=1 // pred_region
      %81 = dma.done [#allocation10], 128
    $region37: #{tpu_custom_call.1} parent=1 // pred_fallthru
      _
    // Predicated region
    $region38: #{tpu_custom_call.1} parent=1 // pred_check
      _
    $region39: #{tpu_custom_call.1} parent=1 // pred_check_branch
      %83 = sbr.rel (0) target = $region41
    $region40: #{tpu_custom_call.1} parent=1 // pred_region
      %84 = dma.done [#allocation10], 4096
    $region41: #{tpu_custom_call.1} parent=1 // pred_fallthru
      _
    %v86 = vld [vmem:[#allocation3] sm:$0xff]
    %v87 = vld [vmem:[#allocation3 + $0x8] sm:$0xff]
    %vm88 = vcmask 1040384
    %vm89 = vsmask.f32 256
    %vm90 = vmand %vm88, %vm89
    %v91 = vld [vmem:[#allocation2] sm:$0x1]
    %v92 = vsel %vm90, 0, %v91
    %93 = vst [vmem:[#allocation2] sm:$0x1] %v92
    %vm94 = vsmask.f32 7938
    %vm95 = vmand %vm88, %vm94
    %v96 = vld [vmem:[#allocation2 + $0x10] sm:$0x1]
    %v97 = vsel %vm95, 0, %v96
    %98 = vst [vmem:[#allocation2 + $0x10] sm:$0x1] %v97
    %v99 = vpack.c.bf16 %v87, %v86
    %v101 = vshrl.u32 %v99, 16
    %v103 = vrot.slane %v101, 7
    %v104 = vshll.u32 %v99, 16
    %v106 = vor.u32 %v103, %v104
    %vm109 = vcmask 1047552
    %vm110 = vmand %vm109, %vm94
    %v111 = vld [vmem:[#allocation2] sm:$0xff]
    %v112 = vsel %vm110, %v106, %v111
    %113 = vst [vmem:[#allocation2] sm:$0xff] %v112
    %v114 = vld [vmem:[#allocation2 + $0x10] sm:$0x1]
    %v115 = vsel %vm90, %v103, %v114
    %116 = vst [vmem:[#allocation2 + $0x10] sm:$0x1] %v115
    %v117 = vld [vmem:[#allocation2] sm:$0xff]
    %v118 = vld [vmem:[#allocation6] sm:$0xff]
    %v119 = vld [vmem:[#allocation6 + $0x8] sm:$0xff]
    %v120 = vld [vmem:[#allocation6 + $0x10] sm:$0xff]
    %v121 = vld [vmem:[#allocation6 + $0x18] sm:$0xff]
    %v122 = vld [vmem:[#allocation6 + $0x20] sm:$0xff]
    %v123 = vld [vmem:[#allocation6 + $0x28] sm:$0xff]
    %v124 = vld [vmem:[#allocation6 + $0x30] sm:$0xff]
    %v125 = vld [vmem:[#allocation6 + $0x38] sm:$0xff]
    %v126 = vld [vmem:[#allocation6 + $0x40] sm:$0xff]
    %v127 = vld [vmem:[#allocation6 + $0x48] sm:$0xff]
    %v128 = vld [vmem:[#allocation6 + $0x50] sm:$0xff]
    %v129 = vld [vmem:[#allocation6 + $0x58] sm:$0xff]
    %v130 = vld [vmem:[#allocation6 + $0x60] sm:$0xff]
    %v131 = vld [vmem:[#allocation6 + $0x68] sm:$0xff]
    %v132 = vld [vmem:[#allocation6 + $0x70] sm:$0xff]
    %v133 = vld [vmem:[#allocation6 + $0x78] sm:$0xff]
    %v134 = vld [vmem:[#allocation2 + $0x10] sm:$0x1]
    %s135 = scalar_lea.vmem [#allocation6], 256
    %v136 = vld [vmem:[%s135] sm:$0xff]
    %v137 = vld [vmem:[%s135 + $0x8] sm:$0xff]
    %v138 = vld [vmem:[%s135 + $0x10] sm:$0xff]
    %v139 = vld [vmem:[%s135 + $0x18] sm:$0xff]
    %v140 = vld [vmem:[%s135 + $0x20] sm:$0xff]
    %v141 = vld [vmem:[%s135 + $0x28] sm:$0xff]
    %v142 = vld [vmem:[%s135 + $0x30] sm:$0xff]
    %v143 = vld [vmem:[%s135 + $0x38] sm:$0xff]
    %v144 = vld [vmem:[%s135 + $0x40] sm:$0xff]
    %v145 = vld [vmem:[%s135 + $0x48] sm:$0xff]
    %v146 = vld [vmem:[%s135 + $0x50] sm:$0xff]
    %v147 = vld [vmem:[%s135 + $0x58] sm:$0xff]
    %v148 = vld [vmem:[%s135 + $0x60] sm:$0xff]
    %v149 = vld [vmem:[%s135 + $0x68] sm:$0xff]
    %v150 = vld [vmem:[%s135 + $0x70] sm:$0xff]
    %v151 = vld [vmem:[%s135 + $0x78] sm:$0xff]
    %vm152 = vsmask.f32 7424
    %v154 = vshrl.u32 %v117, 16
    %v156 = vshll.u32 %v117, 16
    %v158 = vrot.slane %v156, 1
    %v159 = vor.u32 %v154, %v158
    %v161 = vshll.u32 %v134, 16
    %v163 = vrot.slane %v161, 1
    %v164 = vsel %vm152, %v159, %v163
    %v182 = vunpack.c.l.b16 %v136
    %v183 = vunpack.c.h.b16 %v136
    %v184 = vunpack.c.l.b16 %v137
    %v185 = vunpack.c.h.b16 %v137
    %v186 = vunpack.c.l.b16 %v138
    %v187 = vunpack.c.h.b16 %v138
    %v188 = vunpack.c.l.b16 %v139
    %v189 = vunpack.c.h.b16 %v139
    %v190 = vunpack.c.l.b16 %v140
    %v191 = vunpack.c.h.b16 %v140
    %v192 = vunpack.c.l.b16 %v141
    %v193 = vunpack.c.h.b16 %v141
    %v194 = vunpack.c.l.b16 %v142
    %v195 = vunpack.c.h.b16 %v142
    %v196 = vunpack.c.l.b16 %v143
    %v197 = vunpack.c.h.b16 %v143
    %v198 = vunpack.c.l.b16 %v144
    %v199 = vunpack.c.h.b16 %v144
    %v200 = vunpack.c.l.b16 %v145
    %v201 = vunpack.c.h.b16 %v145
    %v202 = vunpack.c.l.b16 %v146
    %v203 = vunpack.c.h.b16 %v146
    %v204 = vunpack.c.l.b16 %v147
    %v205 = vunpack.c.h.b16 %v147
    %v206 = vunpack.c.l.b16 %v148
    %v207 = vunpack.c.h.b16 %v148
    %v208 = vunpack.c.l.b16 %v149
    %v209 = vunpack.c.h.b16 %v149
    %v210 = vunpack.c.l.b16 %v150
    %v211 = vunpack.c.h.b16 %v150
    %v212 = vunpack.c.l.b16 %v151
    %v213 = vunpack.c.h.b16 %v151
    %v214 = vpack.c.b16 %v184, %v182
    %v215 = vpack.c.b16 %v185, %v183
    %v216 = vpack.c.b16 %v188, %v186
    %v217 = vpack.c.b16 %v189, %v187
    %v218 = vpack.c.b16 %v192, %v190
    %v219 = vpack.c.b16 %v193, %v191
    %v220 = vpack.c.b16 %v196, %v194
    %v221 = vpack.c.b16 %v197, %v195
    %v222 = vpack.c.b16 %v200, %v198
    %v223 = vpack.c.b16 %v201, %v199
    %v224 = vpack.c.b16 %v204, %v202
    %v225 = vpack.c.b16 %v205, %v203
    %v226 = vpack.c.b16 %v208, %v206
    %v227 = vpack.c.b16 %v209, %v207
    %v228 = vpack.c.b16 %v212, %v210
    %v229 = vpack.c.b16 %v213, %v211
    %246 = vmatprep.subr.bf16.mxu0 %v215
    %247 = vmatpush1.bf16.msra.mxu0 %v214
    %248 = vmatprep.subr.bf16.mxu0 %v217
    %249 = vmatpush1.bf16.msra.mxu0 %v216
    %250 = vmatprep.subr.bf16.mxu0 %v219
    %251 = vmatpush1.bf16.msra.mxu0 %v218
    %252 = vmatprep.subr.bf16.mxu0 %v221
    %253 = vmatpush1.bf16.msra.mxu0 %v220
    %254 = vmatprep.subr.bf16.mxu0 %v223
    %255 = vmatpush1.bf16.msra.mxu0 %v222
    %256 = vmatprep.subr.bf16.mxu0 %v225
    %257 = vmatpush1.bf16.msra.mxu0 %v224
    %258 = vmatprep.subr.bf16.mxu0 %v227
    %259 = vmatpush1.bf16.msra.mxu0 %v226
    %260 = vmatprep.subr.bf16.mxu0 %v229
    %261 = vmatpush1.bf16.msra.mxu0 %v228
    %262 = vmatprep.subr.bf16.mxu0 0
    %263 = vmatpush1.bf16.msra.mxu0 0
    %264 = vmatprep.subr.bf16.mxu0 0
    %265 = vmatpush1.bf16.msra.mxu0 0
    %266 = vmatprep.subr.bf16.mxu0 0
    %267 = vmatpush1.bf16.msra.mxu0 0
    %268 = vmatprep.subr.bf16.mxu0 0
    %269 = vmatpush1.bf16.msra.mxu0 0
    %270 = vmatprep.subr.bf16.mxu0 0
    %271 = vmatpush1.bf16.msra.mxu0 0
    %272 = vmatprep.subr.bf16.mxu0 0
    %273 = vmatpush1.bf16.msra.mxu0 0
    %274 = vmatprep.subr.bf16.mxu0 0
    %275 = vmatpush1.bf16.msra.mxu0 0
    %276 = vmatprep.subr.bf16.mxu0 0
    %277 = vmatpush1.bf16.msra.mxu0 0
    %278 = vmatprep.mubr.bf16.mxu0 0
    %279 = vmatmul.mubr.bf16.gmra.mrb[0].mxu0 %v164
    %v280 = vpop.f32.mrb[0].mxu0
    %v281 = vadd.f32 0.0, %v280
    %v282 = vpop.f32.mrb[0].mxu0
    %v283 = vadd.f32 0.0, %v282
    %v284 = vpop.f32.mrb[0].mxu0
    %v285 = vadd.f32 0.0, %v284
    %v286 = vpop.f32.mrb[0].mxu0
    %v287 = vadd.f32 0.0, %v286
    %288 = vdwg.mxu0
    %v305 = vunpack.c.l.b16 %v118
    %v306 = vunpack.c.h.b16 %v118
    %v307 = vunpack.c.l.b16 %v119
    %v308 = vunpack.c.h.b16 %v119
    %v309 = vunpack.c.l.b16 %v120
    %v310 = vunpack.c.h.b16 %v120
    %v311 = vunpack.c.l.b16 %v121
    %v312 = vunpack.c.h.b16 %v121
    %v313 = vunpack.c.l.b16 %v122
    %v314 = vunpack.c.h.b16 %v122
    %v315 = vunpack.c.l.b16 %v123
    %v316 = vunpack.c.h.b16 %v123
    %v317 = vunpack.c.l.b16 %v124
    %v318 = vunpack.c.h.b16 %v124
    %v319 = vunpack.c.l.b16 %v125
    %v320 = vunpack.c.h.b16 %v125
    %v321 = vunpack.c.l.b16 %v126
    %v322 = vunpack.c.h.b16 %v126
    %v323 = vunpack.c.l.b16 %v127
    %v324 = vunpack.c.h.b16 %v127
    %v325 = vunpack.c.l.b16 %v128
    %v326 = vunpack.c.h.b16 %v128
    %v327 = vunpack.c.l.b16 %v129
    %v328 = vunpack.c.h.b16 %v129
    %v329 = vunpack.c.l.b16 %v130
    %v330 = vunpack.c.h.b16 %v130
    %v331 = vunpack.c.l.b16 %v131
    %v332 = vunpack.c.h.b16 %v131
    %v333 = vunpack.c.l.b16 %v132
    %v334 = vunpack.c.h.b16 %v132
    %v335 = vunpack.c.l.b16 %v133
    %v336 = vunpack.c.h.b16 %v133
    %v337 = vpack.c.b16 %v307, %v305
    %v338 = vpack.c.b16 %v308, %v306
    %v339 = vpack.c.b16 %v311, %v309
    %v340 = vpack.c.b16 %v312, %v310
    %v341 = vpack.c.b16 %v315, %v313
    %v342 = vpack.c.b16 %v316, %v314
    %v343 = vpack.c.b16 %v319, %v317
    %v344 = vpack.c.b16 %v320, %v318
    %v345 = vpack.c.b16 %v323, %v321
    %v346 = vpack.c.b16 %v324, %v322
    %v347 = vpack.c.b16 %v327, %v325
    %v348 = vpack.c.b16 %v328, %v326
    %v349 = vpack.c.b16 %v331, %v329
    %v350 = vpack.c.b16 %v332, %v330
    %v351 = vpack.c.b16 %v335, %v333
    %v352 = vpack.c.b16 %v336, %v334
    %369 = vmatprep.subr.bf16.mxu0 %v338
    %370 = vmatpush1.bf16.msra.mxu0 %v337
    %371 = vmatprep.subr.bf16.mxu0 %v340
    %372 = vmatpush1.bf16.msra.mxu0 %v339
    %373 = vmatprep.subr.bf16.mxu0 %v342
    %374 = vmatpush1.bf16.msra.mxu0 %v341
    %375 = vmatprep.subr.bf16.mxu0 %v344
    %376 = vmatpush1.bf16.msra.mxu0 %v343
    %377 = vmatprep.subr.bf16.mxu0 %v346
    %378 = vmatpush1.bf16.msra.mxu0 %v345
    %379 = vmatprep.subr.bf16.mxu0 %v348
    %380 = vmatpush1.bf16.msra.mxu0 %v347
    %381 = vmatprep.subr.bf16.mxu0 %v350
    %382 = vmatpush1.bf16.msra.mxu0 %v349
    %383 = vmatprep.subr.bf16.mxu0 %v352
    %384 = vmatpush1.bf16.msra.mxu0 %v351
    %385 = vmatprep.subr.bf16.mxu0 0
    %386 = vmatpush1.bf16.msra.mxu0 0
    %387 = vmatprep.subr.bf16.mxu0 0
    %388 = vmatpush1.bf16.msra.mxu0 0
    %389 = vmatprep.subr.bf16.mxu0 0
    %390 = vmatpush1.bf16.msra.mxu0 0
    %391 = vmatprep.subr.bf16.mxu0 0
    %392 = vmatpush1.bf16.msra.mxu0 0
    %393 = vmatprep.subr.bf16.mxu0 0
    %394 = vmatpush1.bf16.msra.mxu0 0
    %395 = vmatprep.subr.bf16.mxu0 0
    %396 = vmatpush1.bf16.msra.mxu0 0
    %397 = vmatprep.subr.bf16.mxu0 0
    %398 = vmatpush1.bf16.msra.mxu0 0
    %399 = vmatprep.subr.bf16.mxu0 0
    %400 = vmatpush1.bf16.msra.mxu0 0
    %401 = vmatprep.mubr.bf16.mxu0 0
    %402 = vmatmul.mubr.bf16.gmra.mrb[0].mxu0 %v117
    %v403 = vpop.f32.mrb[0].mxu0
    %v404 = vadd.f32 %v281, %v403
    %v405 = vpop.f32.mrb[0].mxu0
    %v406 = vadd.f32 %v283, %v405
    %v407 = vpop.f32.mrb[0].mxu0
    %v408 = vadd.f32 %v285, %v407
    %v409 = vpop.f32.mrb[0].mxu0
    %v410 = vadd.f32 %v287, %v409
    %411 = vdwg.mxu0
    %v412 = vld [vmem:[#allocation2] sm:$0xfe]
    %s413 = scalar_lea.vmem [#allocation6], 512
    %v414 = vld [vmem:[%s413] sm:$0xff]
    %v415 = vld [vmem:[%s413 + $0x8] sm:$0xff]
    %v416 = vld [vmem:[%s413 + $0x10] sm:$0xff]
    %v417 = vld [vmem:[%s413 + $0x18] sm:$0xff]
    %v418 = vld [vmem:[%s413 + $0x20] sm:$0xff]
    %v419 = vld [vmem:[%s413 + $0x28] sm:$0xff]
    %v420 = vld [vmem:[%s413 + $0x30] sm:$0xff]
    %v421 = vld [vmem:[%s413 + $0x38] sm:$0xff]
    %v422 = vld [vmem:[%s413 + $0x40] sm:$0xff]
    %v423 = vld [vmem:[%s413 + $0x48] sm:$0xff]
    %v424 = vld [vmem:[%s413 + $0x50] sm:$0xff]
    %v425 = vld [vmem:[%s413 + $0x58] sm:$0xff]
    %v426 = vld [vmem:[%s413 + $0x60] sm:$0xff]
    %v427 = vld [vmem:[%s413 + $0x68] sm:$0xff]
    %v428 = vld [vmem:[%s413 + $0x70] sm:$0xff]
    %v429 = vld [vmem:[%s413 + $0x78] sm:$0xff]
    %vm432 = vcmask 1046528
    %v433 = vrot.slane %v412, 1
    %v434 = vrot.slane %v134, 1
    %v435 = vsel %vm432, %v433, %v434
    %v453 = vunpack.c.l.b16 %v414
    %v454 = vunpack.c.h.b16 %v414
    %v455 = vunpack.c.l.b16 %v415
    %v456 = vunpack.c.h.b16 %v415
    %v457 = vunpack.c.l.b16 %v416
    %v458 = vunpack.c.h.b16 %v416
    %v459 = vunpack.c.l.b16 %v417
    %v460 = vunpack.c.h.b16 %v417
    %v461 = vunpack.c.l.b16 %v418
    %v462 = vunpack.c.h.b16 %v418
    %v463 = vunpack.c.l.b16 %v419
    %v464 = vunpack.c.h.b16 %v419
    %v465 = vunpack.c.l.b16 %v420
    %v466 = vunpack.c.h.b16 %v420
    %v467 = vunpack.c.l.b16 %v421
    %v468 = vunpack.c.h.b16 %v421
    %v469 = vunpack.c.l.b16 %v422
    %v470 = vunpack.c.h.b16 %v422
    %v471 = vunpack.c.l.b16 %v423
    %v472 = vunpack.c.h.b16 %v423
    %v473 = vunpack.c.l.b16 %v424
    %v474 = vunpack.c.h.b16 %v424
    %v475 = vunpack.c.l.b16 %v425
    %v476 = vunpack.c.h.b16 %v425
    %v477 = vunpack.c.l.b16 %v426
    %v478 = vunpack.c.h.b16 %v426
    %v479 = vunpack.c.l.b16 %v427
    %v480 = vunpack.c.h.b16 %v427
    %v481 = vunpack.c.l.b16 %v428
    %v482 = vunpack.c.h.b16 %v428
    %v483 = vunpack.c.l.b16 %v429
    %v484 = vunpack.c.h.b16 %v429
    %v485 = vpack.c.b16 %v455, %v453
    %v486 = vpack.c.b16 %v456, %v454
    %v487 = vpack.c.b16 %v459, %v457
    %v488 = vpack.c.b16 %v460, %v458
    %v489 = vpack.c.b16 %v463, %v461
    %v490 = vpack.c.b16 %v464, %v462
    %v491 = vpack.c.b16 %v467, %v465
    %v492 = vpack.c.b16 %v468, %v466
    %v493 = vpack.c.b16 %v471, %v469
    %v494 = vpack.c.b16 %v472, %v470
    %v495 = vpack.c.b16 %v475, %v473
    %v496 = vpack.c.b16 %v476, %v474
    %v497 = vpack.c.b16 %v479, %v477
    %v498 = vpack.c.b16 %v480, %v478
    %v499 = vpack.c.b16 %v483, %v481
    %v500 = vpack.c.b16 %v484, %v482
    %517 = vmatprep.subr.bf16.mxu0 %v486
    %518 = vmatpush1.bf16.msra.mxu0 %v485
    %519 = vmatprep.subr.bf16.mxu0 %v488
    %520 = vmatpush1.bf16.msra.mxu0 %v487
    %521 = vmatprep.subr.bf16.mxu0 %v490
    %522 = vmatpush1.bf16.msra.mxu0 %v489
    %523 = vmatprep.subr.bf16.mxu0 %v492
    %524 = vmatpush1.bf16.msra.mxu0 %v491
    %525 = vmatprep.subr.bf16.mxu0 %v494
    %526 = vmatpush1.bf16.msra.mxu0 %v493
    %527 = vmatprep.subr.bf16.mxu0 %v496
    %528 = vmatpush1.bf16.msra.mxu0 %v495
    %529 = vmatprep.subr.bf16.mxu0 %v498
    %530 = vmatpush1.bf16.msra.mxu0 %v497
    %531 = vmatprep.subr.bf16.mxu0 %v500
    %532 = vmatpush1.bf16.msra.mxu0 %v499
    %533 = vmatprep.subr.bf16.mxu0 0
    %534 = vmatpush1.bf16.msra.mxu0 0
    %535 = vmatprep.subr.bf16.mxu0 0
    %536 = vmatpush1.bf16.msra.mxu0 0
    %537 = vmatprep.subr.bf16.mxu0 0
    %538 = vmatpush1.bf16.msra.mxu0 0
    %539 = vmatprep.subr.bf16.mxu0 0
    %540 = vmatpush1.bf16.msra.mxu0 0
    %541 = vmatprep.subr.bf16.mxu0 0
    %542 = vmatpush1.bf16.msra.mxu0 0
    %543 = vmatprep.subr.bf16.mxu0 0
    %544 = vmatpush1.bf16.msra.mxu0 0
    %545 = vmatprep.subr.bf16.mxu0 0
    %546 = vmatpush1.bf16.msra.mxu0 0
    %547 = vmatprep.subr.bf16.mxu0 0
    %548 = vmatpush1.bf16.msra.mxu0 0
    %549 = vmatprep.mubr.bf16.mxu0 0
    %550 = vmatmul.mubr.bf16.gmra.mrb[0].mxu0 %v435
    %v551 = vpop.f32.mrb[0].mxu0
    %v552 = vadd.f32 0.0, %v551
    %v553 = vpop.f32.mrb[0].mxu0
    %v554 = vadd.f32 0.0, %v553
    %v555 = vpop.f32.mrb[0].mxu0
    %v556 = vadd.f32 0.0, %v555
    %v557 = vpop.f32.mrb[0].mxu0
    %v558 = vadd.f32 0.0, %v557
    %559 = vdwg.mxu0
    %v560 = vadd.f32 %v404, %v552
    %v561 = vadd.f32 %v406, %v554
    %v562 = vadd.f32 %v408, %v556
    %v563 = vadd.f32 %v410, %v558
    %v564 = vld [vmem:[#allocation8] ss:$4 sm:$0x3]
    %v566 = vlaneseq
    %v567 = vshrl.u32 %v566, 7
    %v568 = vsub.s32 0, %v567
    %v569 = vrot.slane %v564, %v568
    %v570 = vlaneseq
    %v571 = vshrl.u32 %v570, 7
    %v572 = vsub.s32 1, %v571
    %v573 = vrot.slane %v564, %v572
    %v576 = vadd.f32 %v560, %v569
    %v577 = vadd.f32 %v561, %v573
    %v578 = vadd.f32 %v562, %v569
    %v579 = vadd.f32 %v563, %v573
    %v580 = vmax.f32 %v576, 0.0
    %v581 = vmax.f32 %v577, 0.0
    %v582 = vmax.f32 %v578, 0.0
    %v583 = vmax.f32 %v579, 0.0
    %v584 = vld [vmem:[#allocation2] sm:$0x1]
    %v585 = vsel %vm90, 0, %v584
    %586 = vst [vmem:[#allocation2] sm:$0x1] %v585
    %v587 = vld [vmem:[#allocation2 + $0x8] sm:$0x1]
    %v588 = vsel %vm90, 0, %v587
    %589 = vst [vmem:[#allocation2 + $0x8] sm:$0x1] %v588
    %v590 = vld [vmem:[#allocation2 + $0x10] sm:$0x1]
    %v591 = vsel %vm95, 0, %v590
    %592 = vst [vmem:[#allocation2 + $0x10] sm:$0x1] %v591
    %v593 = vld [vmem:[#allocation2 + $0x18] sm:$0x1]
    %v594 = vsel %vm95, 0, %v593
    %595 = vst [vmem:[#allocation2 + $0x18] sm:$0x1] %v594
    %v596 = vpack.c.bf16 %v582, %v580
    %v597 = vpack.c.bf16 %v583, %v581
    %v599 = vshrl.u32 %v596, 16
    %v601 = vrot.slane %v599, 7
    %v602 = vshll.u32 %v596, 16
    %v604 = vor.u32 %v601, %v602
    %v606 = vshrl.u32 %v597, 16
    %v608 = vrot.slane %v606, 7
    %v609 = vshll.u32 %v597, 16
    %v611 = vor.u32 %v608, %v609
    %v616 = vld [vmem:[#allocation2] sm:$0xff]
    %v617 = vsel %vm110, %v604, %v616
    %618 = vst [vmem:[#allocation2] sm:$0xff] %v617
    %v619 = vld [vmem:[#allocation2 + $0x8] sm:$0xff]
    %v620 = vsel %vm110, %v611, %v619
    %621 = vst [vmem:[#allocation2 + $0x8] sm:$0xff] %v620
    %v622 = vld [vmem:[#allocation2 + $0x10] sm:$0x1]
    %v623 = vsel %vm90, %v601, %v622
    %624 = vst [vmem:[#allocation2 + $0x10] sm:$0x1] %v623
    %v625 = vld [vmem:[#allocation2 + $0x18] sm:$0x1]
    %v626 = vsel %vm90, %v608, %v625
    %627 = vst [vmem:[#allocation2 + $0x18] sm:$0x1] %v626
    %v628 = vld [vmem:[#allocation2] sm:$0xff]
    %v629 = vld [vmem:[#allocation2 + $0x8] sm:$0xff]
    %s630 = scalar_lea.vmem [#allocation6], 768
    %v631 = vld [vmem:[%s630] sm:$0xff]
    %v632 = vld [vmem:[%s630 + $0x8] sm:$0xff]
    %v633 = vld [vmem:[%s630 + $0x10] sm:$0xff]
    %v634 = vld [vmem:[%s630 + $0x18] sm:$0xff]
    %v635 = vld [vmem:[%s630 + $0x20] sm:$0xff]
    %v636 = vld [vmem:[%s630 + $0x28] sm:$0xff]
    %v637 = vld [vmem:[%s630 + $0x30] sm:$0xff]
    %v638 = vld [vmem:[%s630 + $0x38] sm:$0xff]
    %v639 = vld [vmem:[%s630 + $0x40] sm:$0xff]
    %v640 = vld [vmem:[%s630 + $0x48] sm:$0xff]
    %v641 = vld [vmem:[%s630 + $0x50] sm:$0xff]
    %v642 = vld [vmem:[%s630 + $0x58] sm:$0xff]
    %v643 = vld [vmem:[%s630 + $0x60] sm:$0xff]
    %v644 = vld [vmem:[%s630 + $0x68] sm:$0xff]
    %v645 = vld [vmem:[%s630 + $0x70] sm:$0xff]
    %v646 = vld [vmem:[%s630 + $0x78] sm:$0xff]
    %v647 = vld [vmem:[%s630 + $0x80] sm:$0xff]
    %v648 = vld [vmem:[%s630 + $0x88] sm:$0xff]
    %v649 = vld [vmem:[%s630 + $0x90] sm:$0xff]
    %v650 = vld [vmem:[%s630 + $0x98] sm:$0xff]
    %v651 = vld [vmem:[%s630 + $0xa0] sm:$0xff]
    %v652 = vld [vmem:[%s630 + $0xa8] sm:$0xff]
    %v653 = vld [vmem:[%s630 + $0xb0] sm:$0xff]
    %v654 = vld [vmem:[%s630 + $0xb8] sm:$0xff]
    %v655 = vld [vmem:[%s630 + $0xc0] sm:$0xff]
    %v656 = vld [vmem:[%s630 + $0xc8] sm:$0xff]
    %v657 = vld [vmem:[%s630 + $0xd0] sm:$0xff]
    %v658 = vld [vmem:[%s630 + $0xd8] sm:$0xff]
    %v659 = vld [vmem:[%s630 + $0xe0] sm:$0xff]
    %v660 = vld [vmem:[%s630 + $0xe8] sm:$0xff]
    %v661 = vld [vmem:[%s630 + $0xf0] sm:$0xff]
    %v662 = vld [vmem:[%s630 + $0xf8] sm:$0xff]
    %v663 = vld [vmem:[#allocation2] sm:$0xff]
    %v664 = vld [vmem:[#allocation2 + $0x8] sm:$0xff]
    %v665 = vld [vmem:[#allocation2 + $0x10] sm:$0x1]
    %v666 = vld [vmem:[#allocation2 + $0x18] sm:$0x1]
    %s667 = scalar_lea.vmem [#allocation6], 1024
    %v668 = vld [vmem:[%s667] sm:$0xff]
    %v669 = vld [vmem:[%s667 + $0x8] sm:$0xff]
    %v670 = vld [vmem:[%s667 + $0x10] sm:$0xff]
    %v671 = vld [vmem:[%s667 + $0x18] sm:$0xff]
    %v672 = vld [vmem:[%s667 + $0x20] sm:$0xff]
    %v673 = vld [vmem:[%s667 + $0x28] sm:$0xff]
    %v674 = vld [vmem:[%s667 + $0x30] sm:$0xff]
    %v675 = vld [vmem:[%s667 + $0x38] sm:$0xff]
    %v676 = vld [vmem:[%s667 + $0x40] sm:$0xff]
    %v677 = vld [vmem:[%s667 + $0x48] sm:$0xff]
    %v678 = vld [vmem:[%s667 + $0x50] sm:$0xff]
    %v679 = vld [vmem:[%s667 + $0x58] sm:$0xff]
    %v680 = vld [vmem:[%s667 + $0x60] sm:$0xff]
    %v681 = vld [vmem:[%s667 + $0x68] sm:$0xff]
    %v682 = vld [vmem:[%s667 + $0x70] sm:$0xff]
    %v683 = vld [vmem:[%s667 + $0x78] sm:$0xff]
    %v684 = vld [vmem:[%s667 + $0x80] sm:$0xff]
    %v685 = vld [vmem:[%s667 + $0x88] sm:$0xff]
    %v686 = vld [vmem:[%s667 + $0x90] sm:$0xff]
    %v687 = vld [vmem:[%s667 + $0x98] sm:$0xff]
    %v688 = vld [vmem:[%s667 + $0xa0] sm:$0xff]
    %v689 = vld [vmem:[%s667 + $0xa8] sm:$0xff]
    %v690 = vld [vmem:[%s667 + $0xb0] sm:$0xff]
    %v691 = vld [vmem:[%s667 + $0xb8] sm:$0xff]
    %v692 = vld [vmem:[%s667 + $0xc0] sm:$0xff]
    %v693 = vld [vmem:[%s667 + $0xc8] sm:$0xff]
    %v694 = vld [vmem:[%s667 + $0xd0] sm:$0xff]
    %v695 = vld [vmem:[%s667 + $0xd8] sm:$0xff]
    %v696 = vld [vmem:[%s667 + $0xe0] sm:$0xff]
    %v697 = vld [vmem:[%s667 + $0xe8] sm:$0xff]
    %v698 = vld [vmem:[%s667 + $0xf0] sm:$0xff]
    %v699 = vld [vmem:[%s667 + $0xf8] sm:$0xff]
    %v701 = vshrl.u32 %v663, 16
    %v703 = vshll.u32 %v663, 16
    %v705 = vrot.slane %v703, 1
    %v706 = vor.u32 %v701, %v705
    %v708 = vshll.u32 %v665, 16
    %v710 = vrot.slane %v708, 1
    %v711 = vsel %vm152, %v706, %v710
    %v713 = vshrl.u32 %v664, 16
    %v715 = vshll.u32 %v664, 16
    %v717 = vrot.slane %v715, 1
    %v718 = vor.u32 %v713, %v717
    %v720 = vshll.u32 %v666, 16
    %v722 = vrot.slane %v720, 1
    %v723 = vsel %vm152, %v718, %v722
    %v758 = vunpack.c.l.b16 %v668
    %v759 = vunpack.c.h.b16 %v668
    %v760 = vunpack.c.l.b16 %v669
    %v761 = vunpack.c.h.b16 %v669
    %v762 = vunpack.c.l.b16 %v670
    %v763 = vunpack.c.h.b16 %v670
    %v764 = vunpack.c.l.b16 %v671
    %v765 = vunpack.c.h.b16 %v671
    %v766 = vunpack.c.l.b16 %v672
    %v767 = vunpack.c.h.b16 %v672
    %v768 = vunpack.c.l.b16 %v673
    %v769 = vunpack.c.h.b16 %v673
    %v770 = vunpack.c.l.b16 %v674
    %v771 = vunpack.c.h.b16 %v674
    %v772 = vunpack.c.l.b16 %v675
    %v773 = vunpack.c.h.b16 %v675
    %v774 = vunpack.c.l.b16 %v676
    %v775 = vunpack.c.h.b16 %v676
    %v776 = vunpack.c.l.b16 %v677
    %v777 = vunpack.c.h.b16 %v677
    %v778 = vunpack.c.l.b16 %v678
    %v779 = vunpack.c.h.b16 %v678
    %v780 = vunpack.c.l.b16 %v679
    %v781 = vunpack.c.h.b16 %v679
    %v782 = vunpack.c.l.b16 %v680
    %v783 = vunpack.c.h.b16 %v680
    %v784 = vunpack.c.l.b16 %v681
    %v785 = vunpack.c.h.b16 %v681
    %v786 = vunpack.c.l.b16 %v682
    %v787 = vunpack.c.h.b16 %v682
    %v788 = vunpack.c.l.b16 %v683
    %v789 = vunpack.c.h.b16 %v683
    %v790 = vunpack.c.l.b16 %v684
    %v791 = vunpack.c.h.b16 %v684
    %v792 = vunpack.c.l.b16 %v685
    %v793 = vunpack.c.h.b16 %v685
    %v794 = vunpack.c.l.b16 %v686
    %v795 = vunpack.c.h.b16 %v686
    %v796 = vunpack.c.l.b16 %v687
    %v797 = vunpack.c.h.b16 %v687
    %v798 = vunpack.c.l.b16 %v688
    %v799 = vunpack.c.h.b16 %v688
    %v800 = vunpack.c.l.b16 %v689
    %v801 = vunpack.c.h.b16 %v689
    %v802 = vunpack.c.l.b16 %v690
    %v803 = vunpack.c.h.b16 %v690
    %v804 = vunpack.c.l.b16 %v691
    %v805 = vunpack.c.h.b16 %v691
    %v806 = vunpack.c.l.b16 %v692
    %v807 = vunpack.c.h.b16 %v692
    %v808 = vunpack.c.l.b16 %v693
    %v809 = vunpack.c.h.b16 %v693
    %v810 = vunpack.c.l.b16 %v694
    %v811 = vunpack.c.h.b16 %v694
    %v812 = vunpack.c.l.b16 %v695
    %v813 = vunpack.c.h.b16 %v695
    %v814 = vunpack.c.l.b16 %v696
    %v815 = vunpack.c.h.b16 %v696
    %v816 = vunpack.c.l.b16 %v697
    %v817 = vunpack.c.h.b16 %v697
    %v818 = vunpack.c.l.b16 %v698
    %v819 = vunpack.c.h.b16 %v698
    %v820 = vunpack.c.l.b16 %v699
    %v821 = vunpack.c.h.b16 %v699
    %v822 = vpack.c.b16 %v760, %v758
    %v823 = vpack.c.b16 %v761, %v759
    %v824 = vpack.c.b16 %v764, %v762
    %v825 = vpack.c.b16 %v765, %v763
    %v826 = vpack.c.b16 %v768, %v766
    %v827 = vpack.c.b16 %v769, %v767
    %v828 = vpack.c.b16 %v772, %v770
    %v829 = vpack.c.b16 %v773, %v771
    %v830 = vpack.c.b16 %v776, %v774
    %v831 = vpack.c.b16 %v777, %v775
    %v832 = vpack.c.b16 %v780, %v778
    %v833 = vpack.c.b16 %v781, %v779
    %v834 = vpack.c.b16 %v784, %v782
    %v835 = vpack.c.b16 %v785, %v783
    %v836 = vpack.c.b16 %v788, %v786
    %v837 = vpack.c.b16 %v789, %v787
    %v838 = vpack.c.b16 %v792, %v790
    %v839 = vpack.c.b16 %v793, %v791
    %v840 = vpack.c.b16 %v796, %v794
    %v841 = vpack.c.b16 %v797, %v795
    %v842 = vpack.c.b16 %v800, %v798
    %v843 = vpack.c.b16 %v801, %v799
    %v844 = vpack.c.b16 %v804, %v802
    %v845 = vpack.c.b16 %v805, %v803
    %v846 = vpack.c.b16 %v808, %v806
    %v847 = vpack.c.b16 %v809, %v807
    %v848 = vpack.c.b16 %v812, %v810
    %v849 = vpack.c.b16 %v813, %v811
    %v850 = vpack.c.b16 %v816, %v814
    %v851 = vpack.c.b16 %v817, %v815
    %v852 = vpack.c.b16 %v820, %v818
    %v853 = vpack.c.b16 %v821, %v819
    %886 = vmatprep.subr.bf16.mxu0 %v823
    %887 = vmatpush1.bf16.msra.mxu0 %v822
    %888 = vmatprep.subr.bf16.mxu0 %v825
    %889 = vmatpush1.bf16.msra.mxu0 %v824
    %890 = vmatprep.subr.bf16.mxu0 %v827
    %891 = vmatpush1.bf16.msra.mxu0 %v826
    %892 = vmatprep.subr.bf16.mxu0 %v829
    %893 = vmatpush1.bf16.msra.mxu0 %v828
    %894 = vmatprep.subr.bf16.mxu0 %v831
    %895 = vmatpush1.bf16.msra.mxu0 %v830
    %896 = vmatprep.subr.bf16.mxu0 %v833
    %897 = vmatpush1.bf16.msra.mxu0 %v832
    %898 = vmatprep.subr.bf16.mxu0 %v835
    %899 = vmatpush1.bf16.msra.mxu0 %v834
    %900 = vmatprep.subr.bf16.mxu0 %v837
    %901 = vmatpush1.bf16.msra.mxu0 %v836
    %902 = vmatprep.subr.bf16.mxu0 %v839
    %903 = vmatpush1.bf16.msra.mxu0 %v838
    %904 = vmatprep.subr.bf16.mxu0 %v841
    %905 = vmatpush1.bf16.msra.mxu0 %v840
    %906 = vmatprep.subr.bf16.mxu0 %v843
    %907 = vmatpush1.bf16.msra.mxu0 %v842
    %908 = vmatprep.subr.bf16.mxu0 %v845
    %909 = vmatpush1.bf16.msra.mxu0 %v844
    %910 = vmatprep.subr.bf16.mxu0 %v847
    %911 = vmatpush1.bf16.msra.mxu0 %v846
    %912 = vmatprep.subr.bf16.mxu0 %v849
    %913 = vmatpush1.bf16.msra.mxu0 %v848
    %914 = vmatprep.subr.bf16.mxu0 %v851
    %915 = vmatpush1.bf16.msra.mxu0 %v850
    %916 = vmatprep.subr.bf16.mxu0 %v853
    %917 = vmatpush1.bf16.msra.mxu0 %v852
    %918 = vmatprep.mubr.bf16.mxu0 %v723
    %919 = vmatmul.mubr.bf16.gmra.mrb[0].mxu0 %v711
    %v920 = vpop.f32.mrb[0].mxu0
    %v921 = vadd.f32 0.0, %v920
    %v922 = vpop.f32.mrb[0].mxu0
    %v923 = vadd.f32 0.0, %v922
    %v924 = vpop.f32.mrb[0].mxu0
    %v925 = vadd.f32 0.0, %v924
    %v926 = vpop.f32.mrb[0].mxu0
    %v927 = vadd.f32 0.0, %v926
    %928 = vdwg.mxu0
    %v961 = vunpack.c.l.b16 %v631
    %v962 = vunpack.c.h.b16 %v631
    %v963 = vunpack.c.l.b16 %v632
    %v964 = vunpack.c.h.b16 %v632
    %v965 = vunpack.c.l.b16 %v633
    %v966 = vunpack.c.h.b16 %v633
    %v967 = vunpack.c.l.b16 %v634
    %v968 = vunpack.c.h.b16 %v634
    %v969 = vunpack.c.l.b16 %v635
    %v970 = vunpack.c.h.b16 %v635
    %v971 = vunpack.c.l.b16 %v636
    %v972 = vunpack.c.h.b16 %v636
    %v973 = vunpack.c.l.b16 %v637
    %v974 = vunpack.c.h.b16 %v637
    %v975 = vunpack.c.l.b16 %v638
    %v976 = vunpack.c.h.b16 %v638
    %v977 = vunpack.c.l.b16 %v639
    %v978 = vunpack.c.h.b16 %v639
    %v979 = vunpack.c.l.b16 %v640
    %v980 = vunpack.c.h.b16 %v640
    %v981 = vunpack.c.l.b16 %v641
    %v982 = vunpack.c.h.b16 %v641
    %v983 = vunpack.c.l.b16 %v642
    %v984 = vunpack.c.h.b16 %v642
    %v985 = vunpack.c.l.b16 %v643
    %v986 = vunpack.c.h.b16 %v643
    %v987 = vunpack.c.l.b16 %v644
    %v988 = vunpack.c.h.b16 %v644
    %v989 = vunpack.c.l.b16 %v645
    %v990 = vunpack.c.h.b16 %v645
    %v991 = vunpack.c.l.b16 %v646
    %v992 = vunpack.c.h.b16 %v646
    %v993 = vunpack.c.l.b16 %v647
    %v994 = vunpack.c.h.b16 %v647
    %v995 = vunpack.c.l.b16 %v648
    %v996 = vunpack.c.h.b16 %v648
    %v997 = vunpack.c.l.b16 %v649
    %v998 = vunpack.c.h.b16 %v649
    %v999 = vunpack.c.l.b16 %v650
    %v1000 = vunpack.c.h.b16 %v650
    %v1001 = vunpack.c.l.b16 %v651
    %v1002 = vunpack.c.h.b16 %v651
    %v1003 = vunpack.c.l.b16 %v652
    %v1004 = vunpack.c.h.b16 %v652
    %v1005 = vunpack.c.l.b16 %v653
    %v1006 = vunpack.c.h.b16 %v653
    %v1007 = vunpack.c.l.b16 %v654
    %v1008 = vunpack.c.h.b16 %v654
    %v1009 = vunpack.c.l.b16 %v655
    %v1010 = vunpack.c.h.b16 %v655
    %v1011 = vunpack.c.l.b16 %v656
    %v1012 = vunpack.c.h.b16 %v656
    %v1013 = vunpack.c.l.b16 %v657
    %v1014 = vunpack.c.h.b16 %v657
    %v1015 = vunpack.c.l.b16 %v658
    %v1016 = vunpack.c.h.b16 %v658
    %v1017 = vunpack.c.l.b16 %v659
    %v1018 = vunpack.c.h.b16 %v659
    %v1019 = vunpack.c.l.b16 %v660
    %v1020 = vunpack.c.h.b16 %v660
    %v1021 = vunpack.c.l.b16 %v661
    %v1022 = vunpack.c.h.b16 %v661
    %v1023 = vunpack.c.l.b16 %v662
    %v1024 = vunpack.c.h.b16 %v662
    %v1025 = vpack.c.b16 %v963, %v961
    %v1026 = vpack.c.b16 %v964, %v962
    %v1027 = vpack.c.b16 %v967, %v965
    %v1028 = vpack.c.b16 %v968, %v966
    %v1029 = vpack.c.b16 %v971, %v969
    %v1030 = vpack.c.b16 %v972, %v970
    %v1031 = vpack.c.b16 %v975, %v973
    %v1032 = vpack.c.b16 %v976, %v974
    %v1033 = vpack.c.b16 %v979, %v977
    %v1034 = vpack.c.b16 %v980, %v978
    %v1035 = vpack.c.b16 %v983, %v981
    %v1036 = vpack.c.b16 %v984, %v982
    %v1037 = vpack.c.b16 %v987, %v985
    %v1038 = vpack.c.b16 %v988, %v986
    %v1039 = vpack.c.b16 %v991, %v989
    %v1040 = vpack.c.b16 %v992, %v990
    %v1041 = vpack.c.b16 %v995, %v993
    %v1042 = vpack.c.b16 %v996, %v994
    %v1043 = vpack.c.b16 %v999, %v997
    %v1044 = vpack.c.b16 %v1000, %v998
    %v1045 = vpack.c.b16 %v1003, %v1001
    %v1046 = vpack.c.b16 %v1004, %v1002
    %v1047 = vpack.c.b16 %v1007, %v1005
    %v1048 = vpack.c.b16 %v1008, %v1006
    %v1049 = vpack.c.b16 %v1011, %v1009
    %v1050 = vpack.c.b16 %v1012, %v1010
    %v1051 = vpack.c.b16 %v1015, %v1013
    %v1052 = vpack.c.b16 %v1016, %v1014
    %v1053 = vpack.c.b16 %v1019, %v1017
    %v1054 = vpack.c.b16 %v1020, %v1018
    %v1055 = vpack.c.b16 %v1023, %v1021
    %v1056 = vpack.c.b16 %v1024, %v1022
    %1089 = vmatprep.subr.bf16.mxu0 %v1026
    %1090 = vmatpush1.bf16.msra.mxu0 %v1025
    %1091 = vmatprep.subr.bf16.mxu0 %v1028
    %1092 = vmatpush1.bf16.msra.mxu0 %v1027
    %1093 = vmatprep.subr.bf16.mxu0 %v1030
    %1094 = vmatpush1.bf16.msra.mxu0 %v1029
    %1095 = vmatprep.subr.bf16.mxu0 %v1032
    %1096 = vmatpush1.bf16.msra.mxu0 %v1031
    %1097 = vmatprep.subr.bf16.mxu0 %v1034
    %1098 = vmatpush1.bf16.msra.mxu0 %v1033
    %1099 = vmatprep.subr.bf16.mxu0 %v1036
    %1100 = vmatpush1.bf16.msra.mxu0 %v1035
    %1101 = vmatprep.subr.bf16.mxu0 %v1038
    %1102 = vmatpush1.bf16.msra.mxu0 %v1037
    %1103 = vmatprep.subr.bf16.mxu0 %v1040
    %1104 = vmatpush1.bf16.msra.mxu0 %v1039
    %1105 = vmatprep.subr.bf16.mxu0 %v1042
    %1106 = vmatpush1.bf16.msra.mxu0 %v1041
    %1107 = vmatprep.subr.bf16.mxu0 %v1044
    %1108 = vmatpush1.bf16.msra.mxu0 %v1043
    %1109 = vmatprep.subr.bf16.mxu0 %v1046
    %1110 = vmatpush1.bf16.msra.mxu0 %v1045
    %1111 = vmatprep.subr.bf16.mxu0 %v1048
    %1112 = vmatpush1.bf16.msra.mxu0 %v1047
    %1113 = vmatprep.subr.bf16.mxu0 %v1050
    %1114 = vmatpush1.bf16.msra.mxu0 %v1049
    %1115 = vmatprep.subr.bf16.mxu0 %v1052
    %1116 = vmatpush1.bf16.msra.mxu0 %v1051
    %1117 = vmatprep.subr.bf16.mxu0 %v1054
    %1118 = vmatpush1.bf16.msra.mxu0 %v1053
    %1119 = vmatprep.subr.bf16.mxu0 %v1056
    %1120 = vmatpush1.bf16.msra.mxu0 %v1055
    %1121 = vmatprep.mubr.bf16.mxu0 %v629
    %1122 = vmatmul.mubr.bf16.gmra.mrb[0].mxu0 %v628
    %v1123 = vpop.f32.mrb[0].mxu0
    %v1124 = vadd.f32 %v921, %v1123
    %v1125 = vpop.f32.mrb[0].mxu0
    %v1126 = vadd.f32 %v923, %v1125
    %v1127 = vpop.f32.mrb[0].mxu0
    %v1128 = vadd.f32 %v925, %v1127
    %v1129 = vpop.f32.mrb[0].mxu0
    %v1130 = vadd.f32 %v927, %v1129
    %1131 = vdwg.mxu0
    %v1132 = vld [vmem:[#allocation2] sm:$0xfe]
    %v1133 = vld [vmem:[#allocation2 + $0x8] sm:$0xfe]
    %s1134 = scalar_lea.vmem [#allocation6], 1280
    %v1135 = vld [vmem:[%s1134] sm:$0xff]
    %v1136 = vld [vmem:[%s1134 + $0x8] sm:$0xff]
    %v1137 = vld [vmem:[%s1134 + $0x10] sm:$0xff]
    %v1138 = vld [vmem:[%s1134 + $0x18] sm:$0xff]
    %v1139 = vld [vmem:[%s1134 + $0x20] sm:$0xff]
    %v1140 = vld [vmem:[%s1134 + $0x28] sm:$0xff]
    %v1141 = vld [vmem:[%s1134 + $0x30] sm:$0xff]
    %v1142 = vld [vmem:[%s1134 + $0x38] sm:$0xff]
    %v1143 = vld [vmem:[%s1134 + $0x40] sm:$0xff]
    %v1144 = vld [vmem:[%s1134 + $0x48] sm:$0xff]
    %v1145 = vld [vmem:[%s1134 + $0x50] sm:$0xff]
    %v1146 = vld [vmem:[%s1134 + $0x58] sm:$0xff]
    %v1147 = vld [vmem:[%s1134 + $0x60] sm:$0xff]
    %v1148 = vld [vmem:[%s1134 + $0x68] sm:$0xff]
    %v1149 = vld [vmem:[%s1134 + $0x70] sm:$0xff]
    %v1150 = vld [vmem:[%s1134 + $0x78] sm:$0xff]
    %v1151 = vld [vmem:[%s1134 + $0x80] sm:$0xff]
    %v1152 = vld [vmem:[%s1134 + $0x88] sm:$0xff]
    %v1153 = vld [vmem:[%s1134 + $0x90] sm:$0xff]
    %v1154 = vld [vmem:[%s1134 + $0x98] sm:$0xff]
    %v1155 = vld [vmem:[%s1134 + $0xa0] sm:$0xff]
    %v1156 = vld [vmem:[%s1134 + $0xa8] sm:$0xff]
    %v1157 = vld [vmem:[%s1134 + $0xb0] sm:$0xff]
    %v1158 = vld [vmem:[%s1134 + $0xb8] sm:$0xff]
    %v1159 = vld [vmem:[%s1134 + $0xc0] sm:$0xff]
    %v1160 = vld [vmem:[%s1134 + $0xc8] sm:$0xff]
    %v1161 = vld [vmem:[%s1134 + $0xd0] sm:$0xff]
    %v1162 = vld [vmem:[%s1134 + $0xd8] sm:$0xff]
    %v1163 = vld [vmem:[%s1134 + $0xe0] sm:$0xff]
    %v1164 = vld [vmem:[%s1134 + $0xe8] sm:$0xff]
    %v1165 = vld [vmem:[%s1134 + $0xf0] sm:$0xff]
    %v1166 = vld [vmem:[%s1134 + $0xf8] sm:$0xff]
    %v1171 = vrot.slane %v1132, 1
    %v1172 = vrot.slane %v665, 1
    %v1173 = vsel %vm432, %v1171, %v1172
    %v1174 = vrot.slane %v1133, 1
    %v1175 = vrot.slane %v666, 1
    %v1176 = vsel %vm432, %v1174, %v1175
    %v1211 = vunpack.c.l.b16 %v1135
    %v1212 = vunpack.c.h.b16 %v1135
    %v1213 = vunpack.c.l.b16 %v1136
    %v1214 = vunpack.c.h.b16 %v1136
    %v1215 = vunpack.c.l.b16 %v1137
    %v1216 = vunpack.c.h.b16 %v1137
    %v1217 = vunpack.c.l.b16 %v1138
    %v1218 = vunpack.c.h.b16 %v1138
    %v1219 = vunpack.c.l.b16 %v1139
    %v1220 = vunpack.c.h.b16 %v1139
    %v1221 = vunpack.c.l.b16 %v1140
    %v1222 = vunpack.c.h.b16 %v1140
    %v1223 = vunpack.c.l.b16 %v1141
    %v1224 = vunpack.c.h.b16 %v1141
    %v1225 = vunpack.c.l.b16 %v1142
    %v1226 = vunpack.c.h.b16 %v1142
    %v1227 = vunpack.c.l.b16 %v1143
    %v1228 = vunpack.c.h.b16 %v1143
    %v1229 = vunpack.c.l.b16 %v1144
    %v1230 = vunpack.c.h.b16 %v1144
    %v1231 = vunpack.c.l.b16 %v1145
    %v1232 = vunpack.c.h.b16 %v1145
    %v1233 = vunpack.c.l.b16 %v1146
    %v1234 = vunpack.c.h.b16 %v1146
    %v1235 = vunpack.c.l.b16 %v1147
    %v1236 = vunpack.c.h.b16 %v1147
    %v1237 = vunpack.c.l.b16 %v1148
    %v1238 = vunpack.c.h.b16 %v1148
    %v1239 = vunpack.c.l.b16 %v1149
    %v1240 = vunpack.c.h.b16 %v1149
    %v1241 = vunpack.c.l.b16 %v1150
    %v1242 = vunpack.c.h.b16 %v1150
    %v1243 = vunpack.c.l.b16 %v1151
    %v1244 = vunpack.c.h.b16 %v1151
    %v1245 = vunpack.c.l.b16 %v1152
    %v1246 = vunpack.c.h.b16 %v1152
    %v1247 = vunpack.c.l.b16 %v1153
    %v1248 = vunpack.c.h.b16 %v1153
    %v1249 = vunpack.c.l.b16 %v1154
    %v1250 = vunpack.c.h.b16 %v1154
    %v1251 = vunpack.c.l.b16 %v1155
    %v1252 = vunpack.c.h.b16 %v1155
    %v1253 = vunpack.c.l.b16 %v1156
    %v1254 = vunpack.c.h.b16 %v1156
    %v1255 = vunpack.c.l.b16 %v1157
    %v1256 = vunpack.c.h.b16 %v1157
    %v1257 = vunpack.c.l.b16 %v1158
    %v1258 = vunpack.c.h.b16 %v1158
    %v1259 = vunpack.c.l.b16 %v1159
    %v1260 = vunpack.c.h.b16 %v1159
    %v1261 = vunpack.c.l.b16 %v1160
    %v1262 = vunpack.c.h.b16 %v1160
    %v1263 = vunpack.c.l.b16 %v1161
    %v1264 = vunpack.c.h.b16 %v1161
    %v1265 = vunpack.c.l.b16 %v1162
    %v1266 = vunpack.c.h.b16 %v1162
    %v1267 = vunpack.c.l.b16 %v1163
    %v1268 = vunpack.c.h.b16 %v1163
    %v1269 = vunpack.c.l.b16 %v1164
    %v1270 = vunpack.c.h.b16 %v1164
    %v1271 = vunpack.c.l.b16 %v1165
    %v1272 = vunpack.c.h.b16 %v1165
    %v1273 = vunpack.c.l.b16 %v1166
    %v1274 = vunpack.c.h.b16 %v1166
    %v1275 = vpack.c.b16 %v1213, %v1211
    %v1276 = vpack.c.b16 %v1214, %v1212
    %v1277 = vpack.c.b16 %v1217, %v1215
    %v1278 = vpack.c.b16 %v1218, %v1216
    %v1279 = vpack.c.b16 %v1221, %v1219
    %v1280 = vpack.c.b16 %v1222, %v1220
    %v1281 = vpack.c.b16 %v1225, %v1223
    %v1282 = vpack.c.b16 %v1226, %v1224
    %v1283 = vpack.c.b16 %v1229, %v1227
    %v1284 = vpack.c.b16 %v1230, %v1228
    %v1285 = vpack.c.b16 %v1233, %v1231
    %v1286 = vpack.c.b16 %v1234, %v1232
    %v1287 = vpack.c.b16 %v1237, %v1235
    %v1288 = vpack.c.b16 %v1238, %v1236
    %v1289 = vpack.c.b16 %v1241, %v1239
    %v1290 = vpack.c.b16 %v1242, %v1240
    %v1291 = vpack.c.b16 %v1245, %v1243
    %v1292 = vpack.c.b16 %v1246, %v1244
    %v1293 = vpack.c.b16 %v1249, %v1247
    %v1294 = vpack.c.b16 %v1250, %v1248
    %v1295 = vpack.c.b16 %v1253, %v1251
    %v1296 = vpack.c.b16 %v1254, %v1252
    %v1297 = vpack.c.b16 %v1257, %v1255
    %v1298 = vpack.c.b16 %v1258, %v1256
    %v1299 = vpack.c.b16 %v1261, %v1259
    %v1300 = vpack.c.b16 %v1262, %v1260
    %v1301 = vpack.c.b16 %v1265, %v1263
    %v1302 = vpack.c.b16 %v1266, %v1264
    %v1303 = vpack.c.b16 %v1269, %v1267
    %v1304 = vpack.c.b16 %v1270, %v1268
    %v1305 = vpack.c.b16 %v1273, %v1271
    %v1306 = vpack.c.b16 %v1274, %v1272
    %1339 = vmatprep.subr.bf16.mxu0 %v1276
    %1340 = vmatpush1.bf16.msra.mxu0 %v1275
    %1341 = vmatprep.subr.bf16.mxu0 %v1278
    %1342 = vmatpush1.bf16.msra.mxu0 %v1277
    %1343 = vmatprep.subr.bf16.mxu0 %v1280
    %1344 = vmatpush1.bf16.msra.mxu0 %v1279
    %1345 = vmatprep.subr.bf16.mxu0 %v1282
    %1346 = vmatpush1.bf16.msra.mxu0 %v1281
    %1347 = vmatprep.subr.bf16.mxu0 %v1284
    %1348 = vmatpush1.bf16.msra.mxu0 %v1283
    %1349 = vmatprep.subr.bf16.mxu0 %v1286
    %1350 = vmatpush1.bf16.msra.mxu0 %v1285
    %1351 = vmatprep.subr.bf16.mxu0 %v1288
    %1352 = vmatpush1.bf16.msra.mxu0 %v1287
    %1353 = vmatprep.subr.bf16.mxu0 %v1290
    %1354 = vmatpush1.bf16.msra.mxu0 %v1289
    %1355 = vmatprep.subr.bf16.mxu0 %v1292
    %1356 = vmatpush1.bf16.msra.mxu0 %v1291
    %1357 = vmatprep.subr.bf16.mxu0 %v1294
    %1358 = vmatpush1.bf16.msra.mxu0 %v1293
    %1359 = vmatprep.subr.bf16.mxu0 %v1296
    %1360 = vmatpush1.bf16.msra.mxu0 %v1295
    %1361 = vmatprep.subr.bf16.mxu0 %v1298
    %1362 = vmatpush1.bf16.msra.mxu0 %v1297
    %1363 = vmatprep.subr.bf16.mxu0 %v1300
    %1364 = vmatpush1.bf16.msra.mxu0 %v1299
    %1365 = vmatprep.subr.bf16.mxu0 %v1302
    %1366 = vmatpush1.bf16.msra.mxu0 %v1301
    %1367 = vmatprep.subr.bf16.mxu0 %v1304
    %1368 = vmatpush1.bf16.msra.mxu0 %v1303
    %1369 = vmatprep.subr.bf16.mxu0 %v1306
    %1370 = vmatpush1.bf16.msra.mxu0 %v1305
    %1371 = vmatprep.mubr.bf16.mxu0 %v1176
    %1372 = vmatmul.mubr.bf16.gmra.mrb[0].mxu0 %v1173
    %v1373 = vpop.f32.mrb[0].mxu0
    %v1374 = vadd.f32 0.0, %v1373
    %v1375 = vpop.f32.mrb[0].mxu0
    %v1376 = vadd.f32 0.0, %v1375
    %v1377 = vpop.f32.mrb[0].mxu0
    %v1378 = vadd.f32 0.0, %v1377
    %v1379 = vpop.f32.mrb[0].mxu0
    %v1380 = vadd.f32 0.0, %v1379
    %1381 = vdwg.mxu0
    %v1382 = vadd.f32 %v1124, %v1374
    %v1383 = vadd.f32 %v1126, %v1376
    %v1384 = vadd.f32 %v1128, %v1378
    %v1385 = vadd.f32 %v1130, %v1380
    %s1386 = scalar_lea.vmem [#allocation8], 1
    %v1387 = vld [vmem:[%s1386] ss:$4 sm:$0x3]
    %v1389 = vlaneseq
    %v1390 = vshrl.u32 %v1389, 7
    %v1391 = vsub.s32 0, %v1390
    %v1392 = vrot.slane %v1387, %v1391
    %v1393 = vlaneseq
    %v1394 = vshrl.u32 %v1393, 7
    %v1395 = vsub.s32 1, %v1394
    %v1396 = vrot.slane %v1387, %v1395
    %v1399 = vadd.f32 %v1382, %v1392
    %v1400 = vadd.f32 %v1383, %v1396
    %v1401 = vadd.f32 %v1384, %v1392
    %v1402 = vadd.f32 %v1385, %v1396
    %v1403 = vmax.f32 %v1399, 0.0
    %v1404 = vmax.f32 %v1400, 0.0
    %v1405 = vmax.f32 %v1401, 0.0
    %v1406 = vmax.f32 %v1402, 0.0
    %v1407 = vld [vmem:[#allocation9] sm:$0xff]
    %v1408 = vld [vmem:[#allocation11] sm:$0xff]
    %v1409 = vld [vmem:[#allocation11 + $0x8] sm:$0xff]
    %v1410 = vld [vmem:[#allocation11 + $0x10] sm:$0xff]
    %v1411 = vld [vmem:[#allocation11 + $0x18] sm:$0xff]
    %v1412 = vld [vmem:[#allocation11 + $0x20] sm:$0xff]
    %v1413 = vld [vmem:[#allocation11 + $0x28] sm:$0xff]
    %v1414 = vld [vmem:[#allocation11 + $0x30] sm:$0xff]
    %v1415 = vld [vmem:[#allocation11 + $0x38] sm:$0xff]
    %v1416 = vld [vmem:[#allocation11 + $0x40] sm:$0xff]
    %v1417 = vld [vmem:[#allocation11 + $0x48] sm:$0xff]
    %v1418 = vld [vmem:[#allocation11 + $0x50] sm:$0xff]
    %v1419 = vld [vmem:[#allocation11 + $0x58] sm:$0xff]
    %v1420 = vld [vmem:[#allocation11 + $0x60] sm:$0xff]
    %v1421 = vld [vmem:[#allocation11 + $0x68] sm:$0xff]
    %v1422 = vld [vmem:[#allocation11 + $0x70] sm:$0xff]
    %v1423 = vld [vmem:[#allocation11 + $0x78] sm:$0xff]
    %v1424 = vld [vmem:[#allocation11 + $0x80] sm:$0xff]
    %v1425 = vld [vmem:[#allocation11 + $0x88] sm:$0xff]
    %v1426 = vld [vmem:[#allocation11 + $0x90] sm:$0xff]
    %v1427 = vld [vmem:[#allocation11 + $0x98] sm:$0xff]
    %v1428 = vld [vmem:[#allocation11 + $0xa0] sm:$0xff]
    %v1429 = vld [vmem:[#allocation11 + $0xa8] sm:$0xff]
    %v1430 = vld [vmem:[#allocation11 + $0xb0] sm:$0xff]
    %v1431 = vld [vmem:[#allocation11 + $0xb8] sm:$0xff]
    %v1432 = vld [vmem:[#allocation11 + $0xc0] sm:$0xff]
    %v1433 = vld [vmem:[#allocation11 + $0xc8] sm:$0xff]
    %v1434 = vld [vmem:[#allocation11 + $0xd0] sm:$0xff]
    %v1435 = vld [vmem:[#allocation11 + $0xd8] sm:$0xff]
    %v1436 = vld [vmem:[#allocation11 + $0xe0] sm:$0xff]
    %v1437 = vld [vmem:[#allocation11 + $0xe8] sm:$0xff]
    %v1438 = vld [vmem:[#allocation11 + $0xf0] sm:$0xff]
    %v1439 = vld [vmem:[#allocation11 + $0xf8] sm:$0xff]
    %vm1440 = vcmask 130048
    %v1442 = vsel %vm1440, %v1407, 0
    %1444 = vmatprep.subr.mxu0 %v1404
    %1445 = vmatpush1.msra.mxu0 %v1403
    %1446 = vmatprep.subr.mxu0 %v1406
    %1447 = vmatpush1.msra.mxu0 %v1405
    %1448 = vmatprep.subr.mxu0 0.0
    %1449 = vmatpush1.msra.mxu0 0.0
    %1450 = vmatprep.subr.mxu0 0.0
    %1451 = vmatpush1.msra.mxu0 0.0
    %1452 = vmatprep.subr.mxu0 0.0
    %1453 = vmatpush1.msra.mxu0 0.0
    %1454 = vmatprep.subr.mxu0 0.0
    %1455 = vmatpush1.msra.mxu0 0.0
    %1456 = vmatprep.subr.mxu0 0.0
    %1457 = vmatpush1.msra.mxu0 0.0
    %1458 = vmatprep.subr.mxu0 0.0
    %1459 = vmatpush1.msra.mxu0 0.0
    %1460 = vmatprep.subr.mxu0 0.0
    %1461 = vmatpush1.msra.mxu0 0.0
    %1462 = vmatprep.subr.mxu0 0.0
    %1463 = vmatpush1.msra.mxu0 0.0
    %1464 = vmatprep.subr.mxu0 0.0
    %1465 = vmatpush1.msra.mxu0 0.0
    %1466 = vmatprep.subr.mxu0 0.0
    %1467 = vmatpush1.msra.mxu0 0.0
    %1468 = vmatprep.subr.mxu0 0.0
    %1469 = vmatpush1.msra.mxu0 0.0
    %1470 = vmatprep.subr.mxu0 0.0
    %1471 = vmatpush1.msra.mxu0 0.0
    %1472 = vmatprep.subr.mxu0 0.0
    %1473 = vmatpush1.msra.mxu0 0.0
    %1474 = vmatprep.subr.mxu0 0.0
    %1475 = vmatpush1.msra.mxu0 0.0
    %1476 = vmatprep.subr.mxu0 0.0
    %1477 = vmatpush1.msra.mxu0 0.0
    %1478 = vmatprep.subr.mxu0 0.0
    %1479 = vmatpush1.msra.mxu0 0.0
    %1480 = vmatprep.subr.mxu0 0.0
    %1481 = vmatpush1.msra.mxu0 0.0
    %1482 = vmatprep.subr.mxu0 0.0
    %1483 = vmatpush1.msra.mxu0 0.0
    %1484 = vmatprep.subr.mxu0 0.0
    %1485 = vmatpush1.msra.mxu0 0.0
    %1486 = vmatprep.subr.mxu0 0.0
    %1487 = vmatpush1.msra.mxu0 0.0
    %1488 = vmatprep.subr.mxu0 0.0
    %1489 = vmatpush1.msra.mxu0 0.0
    %1490 = vmatprep.subr.mxu0 0.0
    %1491 = vmatpush1.msra.mxu0 0.0
    %1492 = vmatprep.subr.mxu0 0.0
    %1493 = vmatpush1.msra.mxu0 0.0
    %1494 = vmatprep.subr.mxu0 0.0
    %1495 = vmatpush1.msra.mxu0 0.0
    %1496 = vmatprep.subr.mxu0 0.0
    %1497 = vmatpush1.msra.mxu0 0.0
    %1498 = vmatprep.subr.mxu0 0.0
    %1499 = vmatpush1.msra.mxu0 0.0
    %1500 = vmatprep.subr.mxu0 0.0
    %1501 = vmatpush1.msra.mxu0 0.0
    %1502 = vmatprep.subr.mxu0 0.0
    %1503 = vmatpush1.msra.mxu0 0.0
    %1504 = vmatprep.subr.mxu0 0.0
    %1505 = vmatpush1.msra.mxu0 0.0
    %1506 = vmatprep.subr.mxu0 0.0
    %1507 = vmatpush1.msra.mxu0 0.0
    %1508 = vmatprep.mubr.f32.mxu0 0.0
    %1509 = vmatmul.mubr.f32.gmra.mrb[0].mxu0 %v1442
    %v1510 = vpop.f32.mrb[0].mxu0
    %v1511 = vadd.f32 0.0, %v1510
    %v1512 = vpop.f32.mrb[0].mxu0
    %v1513 = vadd.f32 0.0, %v1512
    %1514 = vdwg.mxu0
    %1515 = vmatprep.subr.mxu0 0.0
    %1516 = vmatpush1.msra.mxu0 %v1408
    %1517 = vmatprep.subr.mxu0 0.0
    %1518 = vmatpush1.msra.mxu0 %v1409
    %1519 = vmatprep.subr.mxu0 0.0
    %1520 = vmatpush1.msra.mxu0 %v1410
    %1521 = vmatprep.subr.mxu0 0.0
    %1522 = vmatpush1.msra.mxu0 %v1411
    %1523 = vmatprep.subr.mxu0 0.0
    %1524 = vmatpush1.msra.mxu0 %v1412
    %1525 = vmatprep.subr.mxu0 0.0
    %1526 = vmatpush1.msra.mxu0 %v1413
    %1527 = vmatprep.subr.mxu0 0.0
    %1528 = vmatpush1.msra.mxu0 %v1414
    %1529 = vmatprep.subr.mxu0 0.0
    %1530 = vmatpush1.msra.mxu0 %v1415
    %1531 = vmatprep.subr.mxu0 0.0
    %1532 = vmatpush1.msra.mxu0 %v1416
    %1533 = vmatprep.subr.mxu0 0.0
    %1534 = vmatpush1.msra.mxu0 %v1417
    %1535 = vmatprep.subr.mxu0 0.0
    %1536 = vmatpush1.msra.mxu0 %v1418
    %1537 = vmatprep.subr.mxu0 0.0
    %1538 = vmatpush1.msra.mxu0 %v1419
    %1539 = vmatprep.subr.mxu0 0.0
    %1540 = vmatpush1.msra.mxu0 %v1420
    %1541 = vmatprep.subr.mxu0 0.0
    %1542 = vmatpush1.msra.mxu0 %v1421
    %1543 = vmatprep.subr.mxu0 0.0
    %1544 = vmatpush1.msra.mxu0 %v1422
    %1545 = vmatprep.subr.mxu0 0.0
    %1546 = vmatpush1.msra.mxu0 %v1423
    %1547 = vmatprep.subr.mxu0 0.0
    %1548 = vmatpush1.msra.mxu0 %v1424
    %1549 = vmatprep.subr.mxu0 0.0
    %1550 = vmatpush1.msra.mxu0 %v1425
    %1551 = vmatprep.subr.mxu0 0.0
    %1552 = vmatpush1.msra.mxu0 %v1426
    %1553 = vmatprep.subr.mxu0 0.0
    %1554 = vmatpush1.msra.mxu0 %v1427
    %1555 = vmatprep.subr.mxu0 0.0
    %1556 = vmatpush1.msra.mxu0 %v1428
    %1557 = vmatprep.subr.mxu0 0.0
    %1558 = vmatpush1.msra.mxu0 %v1429
    %1559 = vmatprep.subr.mxu0 0.0
    %1560 = vmatpush1.msra.mxu0 %v1430
    %1561 = vmatprep.subr.mxu0 0.0
    %1562 = vmatpush1.msra.mxu0 %v1431
    %1563 = vmatprep.subr.mxu0 0.0
    %1564 = vmatpush1.msra.mxu0 %v1432
    %1565 = vmatprep.subr.mxu0 0.0
    %1566 = vmatpush1.msra.mxu0 %v1433
    %1567 = vmatprep.subr.mxu0 0.0
    %1568 = vmatpush1.msra.mxu0 %v1434
    %1569 = vmatprep.subr.mxu0 0.0
    %1570 = vmatpush1.msra.mxu0 %v1435
    %1571 = vmatprep.subr.mxu0 0.0
    %1572 = vmatpush1.msra.mxu0 %v1436
    %1573 = vmatprep.subr.mxu0 0.0
    %1574 = vmatpush1.msra.mxu0 %v1437
    %1575 = vmatprep.subr.mxu0 0.0
    %1576 = vmatpush1.msra.mxu0 %v1438
    %1577 = vmatprep.subr.mxu0 0.0
    %1578 = vmatpush1.msra.mxu0 %v1439
    %1579 = vmatprep.mubr.f32.mxu0 %v1513
    %1580 = vmatmul.mubr.f32.gmra.mrb[0].mxu0 %v1511
    %v1581 = vpop.f32.mrb[0].mxu0
    %v1582 = vadd.f32 0.0, %v1581
    %v1583 = vpop.f32.mrb[0].mxu0
    %1584 = vdwg.mxu0
    %v1585 = vld [vmem:[#allocation2] sm:$0x1]
    %v1586 = vsel %vm90, 0, %v1585
    %1587 = vst [vmem:[#allocation2] sm:$0x1] %v1586
    %vm1588 = vcmask 1044484
    %vm1589 = vsmask.f32 7954
    %vm1590 = vmand %vm1588, %vm1589
    %v1591 = vld [vmem:[#allocation2] sm:$0x10]
    %v1592 = vsel %vm1590, 0, %v1591
    %1593 = vst [vmem:[#allocation2] sm:$0x10] %v1592
    %v1594 = vpack.c.bf16 %v1582, %v1582
    %v1596 = vshrl.u32 %v1594, 16
    %v1598 = vrot.slane %v1596, 7
    %v1599 = vshll.u32 %v1594, 16
    %v1601 = vor.u32 %v1598, %v1599
    %vm1603 = vcmask 1044480
    %vm1604 = vsmask.f32 4354
    %vm1605 = vmand %vm1603, %vm1604
    %v1606 = vld [vmem:[#allocation2] sm:$0x1f]
    %v1607 = vsel %vm1605, %v1601, %v1606
    %1608 = vst [vmem:[#allocation2] sm:$0x1f] %v1607
    %v1609 = vld [vmem:[#allocation2] sm:$0xf]
    %s1610 = scalar_lea.vmem [#allocation6], 1536
    %v1611 = vld [vmem:[%s1610] sm:$0xff]
    %v1612 = vld [vmem:[%s1610 + $0x8] sm:$0xff]
    %v1613 = vld [vmem:[%s1610 + $0x10] sm:$0xff]
    %v1614 = vld [vmem:[%s1610 + $0x18] sm:$0xff]
    %v1615 = vld [vmem:[%s1610 + $0x20] sm:$0xff]
    %v1616 = vld [vmem:[%s1610 + $0x28] sm:$0xff]
    %v1617 = vld [vmem:[%s1610 + $0x30] sm:$0xff]
    %v1618 = vld [vmem:[%s1610 + $0x38] sm:$0xff]
    %v1619 = vld [vmem:[%s1610 + $0x40] sm:$0xff]
    %v1620 = vld [vmem:[%s1610 + $0x48] sm:$0xff]
    %v1621 = vld [vmem:[%s1610 + $0x50] sm:$0xff]
    %v1622 = vld [vmem:[%s1610 + $0x58] sm:$0xff]
    %v1623 = vld [vmem:[%s1610 + $0x60] sm:$0xff]
    %v1624 = vld [vmem:[%s1610 + $0x68] sm:$0xff]
    %v1625 = vld [vmem:[%s1610 + $0x70] sm:$0xff]
    %v1626 = vld [vmem:[%s1610 + $0x78] sm:$0xff]
    %v1627 = vld [vmem:[#allocation2] sm:$0x1f]
    %s1628 = scalar_lea.vmem [#allocation6], 1792
    %v1629 = vld [vmem:[%s1628] sm:$0xff]
    %v1630 = vld [vmem:[%s1628 + $0x8] sm:$0xff]
    %v1631 = vld [vmem:[%s1628 + $0x10] sm:$0xff]
    %v1632 = vld [vmem:[%s1628 + $0x18] sm:$0xff]
    %v1633 = vld [vmem:[%s1628 + $0x20] sm:$0xff]
    %v1634 = vld [vmem:[%s1628 + $0x28] sm:$0xff]
    %v1635 = vld [vmem:[%s1628 + $0x30] sm:$0xff]
    %v1636 = vld [vmem:[%s1628 + $0x38] sm:$0xff]
    %v1637 = vld [vmem:[%s1628 + $0x40] sm:$0xff]
    %v1638 = vld [vmem:[%s1628 + $0x48] sm:$0xff]
    %v1639 = vld [vmem:[%s1628 + $0x50] sm:$0xff]
    %v1640 = vld [vmem:[%s1628 + $0x58] sm:$0xff]
    %v1641 = vld [vmem:[%s1628 + $0x60] sm:$0xff]
    %v1642 = vld [vmem:[%s1628 + $0x68] sm:$0xff]
    %v1643 = vld [vmem:[%s1628 + $0x70] sm:$0xff]
    %v1644 = vld [vmem:[%s1628 + $0x78] sm:$0xff]
    %v1646 = vshrl.u32 %v1627, 16
    %v1648 = vshll.u32 %v1627, 16
    %v1650 = vrot.slane %v1648, 1
    %v1651 = vor.u32 %v1646, %v1650
    %v1669 = vunpack.c.l.b16 %v1629
    %v1670 = vunpack.c.h.b16 %v1629
    %v1671 = vunpack.c.l.b16 %v1630
    %v1672 = vunpack.c.h.b16 %v1630
    %v1673 = vunpack.c.l.b16 %v1631
    %v1674 = vunpack.c.h.b16 %v1631
    %v1675 = vunpack.c.l.b16 %v1632
    %v1676 = vunpack.c.h.b16 %v1632
    %v1677 = vunpack.c.l.b16 %v1633
    %v1678 = vunpack.c.h.b16 %v1633
    %v1679 = vunpack.c.l.b16 %v1634
    %v1680 = vunpack.c.h.b16 %v1634
    %v1681 = vunpack.c.l.b16 %v1635
    %v1682 = vunpack.c.h.b16 %v1635
    %v1683 = vunpack.c.l.b16 %v1636
    %v1684 = vunpack.c.h.b16 %v1636
    %v1685 = vunpack.c.l.b16 %v1637
    %v1686 = vunpack.c.h.b16 %v1637
    %v1687 = vunpack.c.l.b16 %v1638
    %v1688 = vunpack.c.h.b16 %v1638
    %v1689 = vunpack.c.l.b16 %v1639
    %v1690 = vunpack.c.h.b16 %v1639
    %v1691 = vunpack.c.l.b16 %v1640
    %v1692 = vunpack.c.h.b16 %v1640
    %v1693 = vunpack.c.l.b16 %v1641
    %v1694 = vunpack.c.h.b16 %v1641
    %v1695 = vunpack.c.l.b16 %v1642
    %v1696 = vunpack.c.h.b16 %v1642
    %v1697 = vunpack.c.l.b16 %v1643
    %v1698 = vunpack.c.h.b16 %v1643
    %v1699 = vunpack.c.l.b16 %v1644
    %v1700 = vunpack.c.h.b16 %v1644
    %v1701 = vpack.c.b16 %v1671, %v1669
    %v1702 = vpack.c.b16 %v1672, %v1670
    %v1703 = vpack.c.b16 %v1675, %v1673
    %v1704 = vpack.c.b16 %v1676, %v1674
    %v1705 = vpack.c.b16 %v1679, %v1677
    %v1706 = vpack.c.b16 %v1680, %v1678
    %v1707 = vpack.c.b16 %v1683, %v1681
    %v1708 = vpack.c.b16 %v1684, %v1682
    %v1709 = vpack.c.b16 %v1687, %v1685
    %v1710 = vpack.c.b16 %v1688, %v1686
    %v1711 = vpack.c.b16 %v1691, %v1689
    %v1712 = vpack.c.b16 %v1692, %v1690
    %v1713 = vpack.c.b16 %v1695, %v1693
    %v1714 = vpack.c.b16 %v1696, %v1694
    %v1715 = vpack.c.b16 %v1699, %v1697
    %v1716 = vpack.c.b16 %v1700, %v1698
    %1733 = vmatprep.subr.bf16.mxu0 %v1702
    %1734 = vmatpush1.bf16.msra.mxu0 %v1701
    %1735 = vmatprep.subr.bf16.mxu0 %v1704
    %1736 = vmatpush1.bf16.msra.mxu0 %v1703
    %1737 = vmatprep.subr.bf16.mxu0 %v1706
    %1738 = vmatpush1.bf16.msra.mxu0 %v1705
    %1739 = vmatprep.subr.bf16.mxu0 %v1708
    %1740 = vmatpush1.bf16.msra.mxu0 %v1707
    %1741 = vmatprep.subr.bf16.mxu0 %v1710
    %1742 = vmatpush1.bf16.msra.mxu0 %v1709
    %1743 = vmatprep.subr.bf16.mxu0 %v1712
    %1744 = vmatpush1.bf16.msra.mxu0 %v1711
    %1745 = vmatprep.subr.bf16.mxu0 %v1714
    %1746 = vmatpush1.bf16.msra.mxu0 %v1713
    %1747 = vmatprep.subr.bf16.mxu0 %v1716
    %1748 = vmatpush1.bf16.msra.mxu0 %v1715
    %1749 = vmatprep.subr.bf16.mxu0 0
    %1750 = vmatpush1.bf16.msra.mxu0 0
    %1751 = vmatprep.subr.bf16.mxu0 0
    %1752 = vmatpush1.bf16.msra.mxu0 0
    %1753 = vmatprep.subr.bf16.mxu0 0
    %1754 = vmatpush1.bf16.msra.mxu0 0
    %1755 = vmatprep.subr.bf16.mxu0 0
    %1756 = vmatpush1.bf16.msra.mxu0 0
    %1757 = vmatprep.subr.bf16.mxu0 0
    %1758 = vmatpush1.bf16.msra.mxu0 0
    %1759 = vmatprep.subr.bf16.mxu0 0
    %1760 = vmatpush1.bf16.msra.mxu0 0
    %1761 = vmatprep.subr.bf16.mxu0 0
    %1762 = vmatpush1.bf16.msra.mxu0 0
    %1763 = vmatprep.subr.bf16.mxu0 0
    %1764 = vmatpush1.bf16.msra.mxu0 0
    %1765 = vmatprep.mubr.bf16.mxu0 0
    %1766 = vmatmul.mubr.bf16.gmra.mrb[0].mxu0 %v1651
    %v1767 = vpop.f32.mrb[0].mxu0
    %v1768 = vadd.f32 0.0, %v1767
    %v1769 = vpop.f32.mrb[0].mxu0
    %v1770 = vadd.f32 0.0, %v1769
    %v1771 = vpop.f32.mrb[0].mxu0
    %v1772 = vpop.f32.mrb[0].mxu0
    %1773 = vdwg.mxu0
    %v1790 = vunpack.c.l.b16 %v1611
    %v1791 = vunpack.c.h.b16 %v1611
    %v1792 = vunpack.c.l.b16 %v1612
    %v1793 = vunpack.c.h.b16 %v1612
    %v1794 = vunpack.c.l.b16 %v1613
    %v1795 = vunpack.c.h.b16 %v1613
    %v1796 = vunpack.c.l.b16 %v1614
    %v1797 = vunpack.c.h.b16 %v1614
    %v1798 = vunpack.c.l.b16 %v1615
    %v1799 = vunpack.c.h.b16 %v1615
    %v1800 = vunpack.c.l.b16 %v1616
    %v1801 = vunpack.c.h.b16 %v1616
    %v1802 = vunpack.c.l.b16 %v1617
    %v1803 = vunpack.c.h.b16 %v1617
    %v1804 = vunpack.c.l.b16 %v1618
    %v1805 = vunpack.c.h.b16 %v1618
    %v1806 = vunpack.c.l.b16 %v1619
    %v1807 = vunpack.c.h.b16 %v1619
    %v1808 = vunpack.c.l.b16 %v1620
    %v1809 = vunpack.c.h.b16 %v1620
    %v1810 = vunpack.c.l.b16 %v1621
    %v1811 = vunpack.c.h.b16 %v1621
    %v1812 = vunpack.c.l.b16 %v1622
    %v1813 = vunpack.c.h.b16 %v1622
    %v1814 = vunpack.c.l.b16 %v1623
    %v1815 = vunpack.c.h.b16 %v1623
    %v1816 = vunpack.c.l.b16 %v1624
    %v1817 = vunpack.c.h.b16 %v1624
    %v1818 = vunpack.c.l.b16 %v1625
    %v1819 = vunpack.c.h.b16 %v1625
    %v1820 = vunpack.c.l.b16 %v1626
    %v1821 = vunpack.c.h.b16 %v1626
    %v1822 = vpack.c.b16 %v1792, %v1790
    %v1823 = vpack.c.b16 %v1793, %v1791
    %v1824 = vpack.c.b16 %v1796, %v1794
    %v1825 = vpack.c.b16 %v1797, %v1795
    %v1826 = vpack.c.b16 %v1800, %v1798
    %v1827 = vpack.c.b16 %v1801, %v1799
    %v1828 = vpack.c.b16 %v1804, %v1802
    %v1829 = vpack.c.b16 %v1805, %v1803
    %v1830 = vpack.c.b16 %v1808, %v1806
    %v1831 = vpack.c.b16 %v1809, %v1807
    %v1832 = vpack.c.b16 %v1812, %v1810
    %v1833 = vpack.c.b16 %v1813, %v1811
    %v1834 = vpack.c.b16 %v1816, %v1814
    %v1835 = vpack.c.b16 %v1817, %v1815
    %v1836 = vpack.c.b16 %v1820, %v1818
    %v1837 = vpack.c.b16 %v1821, %v1819
    %1854 = vmatprep.subr.bf16.mxu0 %v1823
    %1855 = vmatpush1.bf16.msra.mxu0 %v1822
    %1856 = vmatprep.subr.bf16.mxu0 %v1825
    %1857 = vmatpush1.bf16.msra.mxu0 %v1824
    %1858 = vmatprep.subr.bf16.mxu0 %v1827
    %1859 = vmatpush1.bf16.msra.mxu0 %v1826
    %1860 = vmatprep.subr.bf16.mxu0 %v1829
    %1861 = vmatpush1.bf16.msra.mxu0 %v1828
    %1862 = vmatprep.subr.bf16.mxu0 %v1831
    %1863 = vmatpush1.bf16.msra.mxu0 %v1830
    %1864 = vmatprep.subr.bf16.mxu0 %v1833
    %1865 = vmatpush1.bf16.msra.mxu0 %v1832
    %1866 = vmatprep.subr.bf16.mxu0 %v1835
    %1867 = vmatpush1.bf16.msra.mxu0 %v1834
    %1868 = vmatprep.subr.bf16.mxu0 %v1837
    %1869 = vmatpush1.bf16.msra.mxu0 %v1836
    %1870 = vmatprep.subr.bf16.mxu0 0
    %1871 = vmatpush1.bf16.msra.mxu0 0
    %1872 = vmatprep.subr.bf16.mxu0 0
    %1873 = vmatpush1.bf16.msra.mxu0 0
    %1874 = vmatprep.subr.bf16.mxu0 0
    %1875 = vmatpush1.bf16.msra.mxu0 0
    %1876 = vmatprep.subr.bf16.mxu0 0
    %1877 = vmatpush1.bf16.msra.mxu0 0
    %1878 = vmatprep.subr.bf16.mxu0 0
    %1879 = vmatpush1.bf16.msra.mxu0 0
    %1880 = vmatprep.subr.bf16.mxu0 0
    %1881 = vmatpush1.bf16.msra.mxu0 0
    %1882 = vmatprep.subr.bf16.mxu0 0
    %1883 = vmatpush1.bf16.msra.mxu0 0
    %1884 = vmatprep.subr.bf16.mxu0 0
    %1885 = vmatpush1.bf16.msra.mxu0 0
    %1886 = vmatprep.mubr.bf16.mxu0 0
    %1887 = vmatmul.mubr.bf16.gmra.mrb[0].mxu0 %v1609
    %v1888 = vpop.f32.mrb[0].mxu0
    %v1889 = vadd.f32 %v1768, %v1888
    %v1890 = vpop.f32.mrb[0].mxu0
    %v1891 = vadd.f32 %v1770, %v1890
    %v1892 = vpop.f32.mrb[0].mxu0
    %v1893 = vpop.f32.mrb[0].mxu0
    %1894 = vdwg.mxu0
    %v1895 = vld [vmem:[#allocation2] sm:$0x1e]
    %s1896 = scalar_lea.vmem [#allocation6], 2048
    %v1897 = vld [vmem:[%s1896] sm:$0xff]
    %v1898 = vld [vmem:[%s1896 + $0x8] sm:$0xff]
    %v1899 = vld [vmem:[%s1896 + $0x10] sm:$0xff]
    %v1900 = vld [vmem:[%s1896 + $0x18] sm:$0xff]
    %v1901 = vld [vmem:[%s1896 + $0x20] sm:$0xff]
    %v1902 = vld [vmem:[%s1896 + $0x28] sm:$0xff]
    %v1903 = vld [vmem:[%s1896 + $0x30] sm:$0xff]
    %v1904 = vld [vmem:[%s1896 + $0x38] sm:$0xff]
    %v1905 = vld [vmem:[%s1896 + $0x40] sm:$0xff]
    %v1906 = vld [vmem:[%s1896 + $0x48] sm:$0xff]
    %v1907 = vld [vmem:[%s1896 + $0x50] sm:$0xff]
    %v1908 = vld [vmem:[%s1896 + $0x58] sm:$0xff]
    %v1909 = vld [vmem:[%s1896 + $0x60] sm:$0xff]
    %v1910 = vld [vmem:[%s1896 + $0x68] sm:$0xff]
    %v1911 = vld [vmem:[%s1896 + $0x70] sm:$0xff]
    %v1912 = vld [vmem:[%s1896 + $0x78] sm:$0xff]
    %v1914 = vrot.slane %v1895, 1
    %v1932 = vunpack.c.l.b16 %v1897
    %v1933 = vunpack.c.h.b16 %v1897
    %v1934 = vunpack.c.l.b16 %v1898
    %v1935 = vunpack.c.h.b16 %v1898
    %v1936 = vunpack.c.l.b16 %v1899
    %v1937 = vunpack.c.h.b16 %v1899
    %v1938 = vunpack.c.l.b16 %v1900
    %v1939 = vunpack.c.h.b16 %v1900
    %v1940 = vunpack.c.l.b16 %v1901
    %v1941 = vunpack.c.h.b16 %v1901
    %v1942 = vunpack.c.l.b16 %v1902
    %v1943 = vunpack.c.h.b16 %v1902
    %v1944 = vunpack.c.l.b16 %v1903
    %v1945 = vunpack.c.h.b16 %v1903
    %v1946 = vunpack.c.l.b16 %v1904
    %v1947 = vunpack.c.h.b16 %v1904
    %v1948 = vunpack.c.l.b16 %v1905
    %v1949 = vunpack.c.h.b16 %v1905
    %v1950 = vunpack.c.l.b16 %v1906
    %v1951 = vunpack.c.h.b16 %v1906
    %v1952 = vunpack.c.l.b16 %v1907
    %v1953 = vunpack.c.h.b16 %v1907
    %v1954 = vunpack.c.l.b16 %v1908
    %v1955 = vunpack.c.h.b16 %v1908
    %v1956 = vunpack.c.l.b16 %v1909
    %v1957 = vunpack.c.h.b16 %v1909
    %v1958 = vunpack.c.l.b16 %v1910
    %v1959 = vunpack.c.h.b16 %v1910
    %v1960 = vunpack.c.l.b16 %v1911
    %v1961 = vunpack.c.h.b16 %v1911
    %v1962 = vunpack.c.l.b16 %v1912
    %v1963 = vunpack.c.h.b16 %v1912
    %v1964 = vpack.c.b16 %v1934, %v1932
    %v1965 = vpack.c.b16 %v1935, %v1933
    %v1966 = vpack.c.b16 %v1938, %v1936
    %v1967 = vpack.c.b16 %v1939, %v1937
    %v1968 = vpack.c.b16 %v1942, %v1940
    %v1969 = vpack.c.b16 %v1943, %v1941
    %v1970 = vpack.c.b16 %v1946, %v1944
    %v1971 = vpack.c.b16 %v1947, %v1945
    %v1972 = vpack.c.b16 %v1950, %v1948
    %v1973 = vpack.c.b16 %v1951, %v1949
    %v1974 = vpack.c.b16 %v1954, %v1952
    %v1975 = vpack.c.b16 %v1955, %v1953
    %v1976 = vpack.c.b16 %v1958, %v1956
    %v1977 = vpack.c.b16 %v1959, %v1957
    %v1978 = vpack.c.b16 %v1962, %v1960
    %v1979 = vpack.c.b16 %v1963, %v1961
    %1996 = vmatprep.subr.bf16.mxu0 %v1965
    %1997 = vmatpush1.bf16.msra.mxu0 %v1964
    %1998 = vmatprep.subr.bf16.mxu0 %v1967
    %1999 = vmatpush1.bf16.msra.mxu0 %v1966
    %2000 = vmatprep.subr.bf16.mxu0 %v1969
    %2001 = vmatpush1.bf16.msra.mxu0 %v1968
    %2002 = vmatprep.subr.bf16.mxu0 %v1971
    %2003 = vmatpush1.bf16.msra.mxu0 %v1970
    %2004 = vmatprep.subr.bf16.mxu0 %v1973
    %2005 = vmatpush1.bf16.msra.mxu0 %v1972
    %2006 = vmatprep.subr.bf16.mxu0 %v1975
    %2007 = vmatpush1.bf16.msra.mxu0 %v1974
    %2008 = vmatprep.subr.bf16.mxu0 %v1977
    %2009 = vmatpush1.bf16.msra.mxu0 %v1976
    %2010 = vmatprep.subr.bf16.mxu0 %v1979
    %2011 = vmatpush1.bf16.msra.mxu0 %v1978
    %2012 = vmatprep.subr.bf16.mxu0 0
    %2013 = vmatpush1.bf16.msra.mxu0 0
    %2014 = vmatprep.subr.bf16.mxu0 0
    %2015 = vmatpush1.bf16.msra.mxu0 0
    %2016 = vmatprep.subr.bf16.mxu0 0
    %2017 = vmatpush1.bf16.msra.mxu0 0
    %2018 = vmatprep.subr.bf16.mxu0 0
    %2019 = vmatpush1.bf16.msra.mxu0 0
    %2020 = vmatprep.subr.bf16.mxu0 0
    %2021 = vmatpush1.bf16.msra.mxu0 0
    %2022 = vmatprep.subr.bf16.mxu0 0
    %2023 = vmatpush1.bf16.msra.mxu0 0
    %2024 = vmatprep.subr.bf16.mxu0 0
    %2025 = vmatpush1.bf16.msra.mxu0 0
    %2026 = vmatprep.subr.bf16.mxu0 0
    %2027 = vmatpush1.bf16.msra.mxu0 0
    %2028 = vmatprep.mubr.bf16.mxu0 0
    %2029 = vmatmul.mubr.bf16.gmra.mrb[0].mxu0 %v1914
    %v2030 = vpop.f32.mrb[0].mxu0
    %v2031 = vadd.f32 0.0, %v2030
    %v2032 = vpop.f32.mrb[0].mxu0
    %v2033 = vadd.f32 0.0, %v2032
    %v2034 = vpop.f32.mrb[0].mxu0
    %v2035 = vpop.f32.mrb[0].mxu0
    %2036 = vdwg.mxu0
    %v2037 = vadd.f32 %v1889, %v2031
    %v2038 = vadd.f32 %v1891, %v2033
    %s2039 = scalar_lea.vmem [#allocation8], 2
    %v2040 = vld [vmem:[%s2039] ss:$4 sm:$0x3]
    %v2042 = vlaneseq
    %v2043 = vshrl.u32 %v2042, 7
    %v2044 = vsub.s32 0, %v2043
    %v2045 = vrot.slane %v2040, %v2044
    %v2046 = vlaneseq
    %v2047 = vshrl.u32 %v2046, 7
    %v2048 = vsub.s32 1, %v2047
    %v2049 = vrot.slane %v2040, %v2048
    %v2052 = vadd.f32 %v2037, %v2045
    %v2053 = vadd.f32 %v2038, %v2049
    %v2054 = vmax.f32 %v2052, 0.0
    %v2055 = vmax.f32 %v2053, 0.0
    %v2056 = vld [vmem:[#allocation2] sm:$0x1]
    %v2057 = vsel %vm90, 0, %v2056
    %2058 = vst [vmem:[#allocation2] sm:$0x1] %v2057
    %v2059 = vld [vmem:[#allocation2 + $0x8] sm:$0x1]
    %v2060 = vsel %vm90, 0, %v2059
    %2061 = vst [vmem:[#allocation2 + $0x8] sm:$0x1] %v2060
    %v2062 = vld [vmem:[#allocation2] sm:$0x10]
    %v2063 = vsel %vm1590, 0, %v2062
    %2064 = vst [vmem:[#allocation2] sm:$0x10] %v2063
    %v2065 = vld [vmem:[#allocation2 + $0x8] sm:$0x10]
    %v2066 = vsel %vm1590, 0, %v2065
    %2067 = vst [vmem:[#allocation2 + $0x8] sm:$0x10] %v2066
    %v2068 = vpack.c.bf16 %v2054, %v2054
    %v2069 = vpack.c.bf16 %v2055, %v2055
    %v2071 = vshrl.u32 %v2068, 16
    %v2073 = vrot.slane %v2071, 7
    %v2074 = vshll.u32 %v2068, 16
    %v2076 = vor.u32 %v2073, %v2074
    %v2078 = vshrl.u32 %v2069, 16
    %v2080 = vrot.slane %v2078, 7
    %v2081 = vshll.u32 %v2069, 16
    %v2083 = vor.u32 %v2080, %v2081
    %v2086 = vld [vmem:[#allocation2] sm:$0x1f]
    %v2087 = vsel %vm1605, %v2076, %v2086
    %2088 = vst [vmem:[#allocation2] sm:$0x1f] %v2087
    %v2089 = vld [vmem:[#allocation2 + $0x8] sm:$0x1f]
    %v2090 = vsel %vm1605, %v2083, %v2089
    %2091 = vst [vmem:[#allocation2 + $0x8] sm:$0x1f] %v2090
    %v2092 = vld [vmem:[#allocation2] sm:$0xf]
    %v2093 = vld [vmem:[#allocation2 + $0x8] sm:$0xf]
    %s2094 = scalar_lea.vmem [#allocation6], 2304
    %v2095 = vld [vmem:[%s2094] sm:$0xff]
    %v2096 = vld [vmem:[%s2094 + $0x8] sm:$0xff]
    %v2097 = vld [vmem:[%s2094 + $0x10] sm:$0xff]
    %v2098 = vld [vmem:[%s2094 + $0x18] sm:$0xff]
    %v2099 = vld [vmem:[%s2094 + $0x20] sm:$0xff]
    %v2100 = vld [vmem:[%s2094 + $0x28] sm:$0xff]
    %v2101 = vld [vmem:[%s2094 + $0x30] sm:$0xff]
    %v2102 = vld [vmem:[%s2094 + $0x38] sm:$0xff]
    %v2103 = vld [vmem:[%s2094 + $0x40] sm:$0xff]
    %v2104 = vld [vmem:[%s2094 + $0x48] sm:$0xff]
    %v2105 = vld [vmem:[%s2094 + $0x50] sm:$0xff]
    %v2106 = vld [vmem:[%s2094 + $0x58] sm:$0xff]
    %v2107 = vld [vmem:[%s2094 + $0x60] sm:$0xff]
    %v2108 = vld [vmem:[%s2094 + $0x68] sm:$0xff]
    %v2109 = vld [vmem:[%s2094 + $0x70] sm:$0xff]
    %v2110 = vld [vmem:[%s2094 + $0x78] sm:$0xff]
    %v2111 = vld [vmem:[%s2094 + $0x80] sm:$0xff]
    %v2112 = vld [vmem:[%s2094 + $0x88] sm:$0xff]
    %v2113 = vld [vmem:[%s2094 + $0x90] sm:$0xff]
    %v2114 = vld [vmem:[%s2094 + $0x98] sm:$0xff]
    %v2115 = vld [vmem:[%s2094 + $0xa0] sm:$0xff]
    %v2116 = vld [vmem:[%s2094 + $0xa8] sm:$0xff]
    %v2117 = vld [vmem:[%s2094 + $0xb0] sm:$0xff]
    %v2118 = vld [vmem:[%s2094 + $0xb8] sm:$0xff]
    %v2119 = vld [vmem:[%s2094 + $0xc0] sm:$0xff]
    %v2120 = vld [vmem:[%s2094 + $0xc8] sm:$0xff]
    %v2121 = vld [vmem:[%s2094 + $0xd0] sm:$0xff]
    %v2122 = vld [vmem:[%s2094 + $0xd8] sm:$0xff]
    %v2123 = vld [vmem:[%s2094 + $0xe0] sm:$0xff]
    %v2124 = vld [vmem:[%s2094 + $0xe8] sm:$0xff]
    %v2125 = vld [vmem:[%s2094 + $0xf0] sm:$0xff]
    %v2126 = vld [vmem:[%s2094 + $0xf8] sm:$0xff]
    %v2127 = vld [vmem:[#allocation2] sm:$0x1f]
    %v2128 = vld [vmem:[#allocation2 + $0x8] sm:$0x1f]
    %s2129 = scalar_lea.vmem [#allocation6], 2560
    %v2130 = vld [vmem:[%s2129] sm:$0xff]
    %v2131 = vld [vmem:[%s2129 + $0x8] sm:$0xff]
    %v2132 = vld [vmem:[%s2129 + $0x10] sm:$0xff]
    %v2133 = vld [vmem:[%s2129 + $0x18] sm:$0xff]
    %v2134 = vld [vmem:[%s2129 + $0x20] sm:$0xff]
    %v2135 = vld [vmem:[%s2129 + $0x28] sm:$0xff]
    %v2136 = vld [vmem:[%s2129 + $0x30] sm:$0xff]
    %v2137 = vld [vmem:[%s2129 + $0x38] sm:$0xff]
    %v2138 = vld [vmem:[%s2129 + $0x40] sm:$0xff]
    %v2139 = vld [vmem:[%s2129 + $0x48] sm:$0xff]
    %v2140 = vld [vmem:[%s2129 + $0x50] sm:$0xff]
    %v2141 = vld [vmem:[%s2129 + $0x58] sm:$0xff]
    %v2142 = vld [vmem:[%s2129 + $0x60] sm:$0xff]
    %v2143 = vld [vmem:[%s2129 + $0x68] sm:$0xff]
    %v2144 = vld [vmem:[%s2129 + $0x70] sm:$0xff]
    %v2145 = vld [vmem:[%s2129 + $0x78] sm:$0xff]
    %v2146 = vld [vmem:[%s2129 + $0x80] sm:$0xff]
    %v2147 = vld [vmem:[%s2129 + $0x88] sm:$0xff]
    %v2148 = vld [vmem:[%s2129 + $0x90] sm:$0xff]
    %v2149 = vld [vmem:[%s2129 + $0x98] sm:$0xff]
    %v2150 = vld [vmem:[%s2129 + $0xa0] sm:$0xff]
    %v2151 = vld [vmem:[%s2129 + $0xa8] sm:$0xff]
    %v2152 = vld [vmem:[%s2129 + $0xb0] sm:$0xff]
    %v2153 = vld [vmem:[%s2129 + $0xb8] sm:$0xff]
    %v2154 = vld [vmem:[%s2129 + $0xc0] sm:$0xff]
    %v2155 = vld [vmem:[%s2129 + $0xc8] sm:$0xff]
    %v2156 = vld [vmem:[%s2129 + $0xd0] sm:$0xff]
    %v2157 = vld [vmem:[%s2129 + $0xd8] sm:$0xff]
    %v2158 = vld [vmem:[%s2129 + $0xe0] sm:$0xff]
    %v2159 = vld [vmem:[%s2129 + $0xe8] sm:$0xff]
    %v2160 = vld [vmem:[%s2129 + $0xf0] sm:$0xff]
    %v2161 = vld [vmem:[%s2129 + $0xf8] sm:$0xff]
    %v2163 = vshrl.u32 %v2127, 16
    %v2165 = vshll.u32 %v2127, 16
    %v2167 = vrot.slane %v2165, 1
    %v2168 = vor.u32 %v2163, %v2167
    %v2170 = vshrl.u32 %v2128, 16
    %v2172 = vshll.u32 %v2128, 16
    %v2174 = vrot.slane %v2172, 1
    %v2175 = vor.u32 %v2170, %v2174
    %v2210 = vunpack.c.l.b16 %v2130
    %v2211 = vunpack.c.h.b16 %v2130
    %v2212 = vunpack.c.l.b16 %v2131
    %v2213 = vunpack.c.h.b16 %v2131
    %v2214 = vunpack.c.l.b16 %v2132
    %v2215 = vunpack.c.h.b16 %v2132
    %v2216 = vunpack.c.l.b16 %v2133
    %v2217 = vunpack.c.h.b16 %v2133
    %v2218 = vunpack.c.l.b16 %v2134
    %v2219 = vunpack.c.h.b16 %v2134
    %v2220 = vunpack.c.l.b16 %v2135
    %v2221 = vunpack.c.h.b16 %v2135
    %v2222 = vunpack.c.l.b16 %v2136
    %v2223 = vunpack.c.h.b16 %v2136
    %v2224 = vunpack.c.l.b16 %v2137
    %v2225 = vunpack.c.h.b16 %v2137
    %v2226 = vunpack.c.l.b16 %v2138
    %v2227 = vunpack.c.h.b16 %v2138
    %v2228 = vunpack.c.l.b16 %v2139
    %v2229 = vunpack.c.h.b16 %v2139
    %v2230 = vunpack.c.l.b16 %v2140
    %v2231 = vunpack.c.h.b16 %v2140
    %v2232 = vunpack.c.l.b16 %v2141
    %v2233 = vunpack.c.h.b16 %v2141
    %v2234 = vunpack.c.l.b16 %v2142
    %v2235 = vunpack.c.h.b16 %v2142
    %v2236 = vunpack.c.l.b16 %v2143
    %v2237 = vunpack.c.h.b16 %v2143
    %v2238 = vunpack.c.l.b16 %v2144
    %v2239 = vunpack.c.h.b16 %v2144
    %v2240 = vunpack.c.l.b16 %v2145
    %v2241 = vunpack.c.h.b16 %v2145
    %v2242 = vunpack.c.l.b16 %v2146
    %v2243 = vunpack.c.h.b16 %v2146
    %v2244 = vunpack.c.l.b16 %v2147
    %v2245 = vunpack.c.h.b16 %v2147
    %v2246 = vunpack.c.l.b16 %v2148
    %v2247 = vunpack.c.h.b16 %v2148
    %v2248 = vunpack.c.l.b16 %v2149
    %v2249 = vunpack.c.h.b16 %v2149
    %v2250 = vunpack.c.l.b16 %v2150
    %v2251 = vunpack.c.h.b16 %v2150
    %v2252 = vunpack.c.l.b16 %v2151
    %v2253 = vunpack.c.h.b16 %v2151
    %v2254 = vunpack.c.l.b16 %v2152
    %v2255 = vunpack.c.h.b16 %v2152
    %v2256 = vunpack.c.l.b16 %v2153
    %v2257 = vunpack.c.h.b16 %v2153
    %v2258 = vunpack.c.l.b16 %v2154
    %v2259 = vunpack.c.h.b16 %v2154
    %v2260 = vunpack.c.l.b16 %v2155
    %v2261 = vunpack.c.h.b16 %v2155
    %v2262 = vunpack.c.l.b16 %v2156
    %v2263 = vunpack.c.h.b16 %v2156
    %v2264 = vunpack.c.l.b16 %v2157
    %v2265 = vunpack.c.h.b16 %v2157
    %v2266 = vunpack.c.l.b16 %v2158
    %v2267 = vunpack.c.h.b16 %v2158
    %v2268 = vunpack.c.l.b16 %v2159
    %v2269 = vunpack.c.h.b16 %v2159
    %v2270 = vunpack.c.l.b16 %v2160
    %v2271 = vunpack.c.h.b16 %v2160
    %v2272 = vunpack.c.l.b16 %v2161
    %v2273 = vunpack.c.h.b16 %v2161
    %v2274 = vpack.c.b16 %v2212, %v2210
    %v2275 = vpack.c.b16 %v2213, %v2211
    %v2276 = vpack.c.b16 %v2216, %v2214
    %v2277 = vpack.c.b16 %v2217, %v2215
    %v2278 = vpack.c.b16 %v2220, %v2218
    %v2279 = vpack.c.b16 %v2221, %v2219
    %v2280 = vpack.c.b16 %v2224, %v2222
    %v2281 = vpack.c.b16 %v2225, %v2223
    %v2282 = vpack.c.b16 %v2228, %v2226
    %v2283 = vpack.c.b16 %v2229, %v2227
    %v2284 = vpack.c.b16 %v2232, %v2230
    %v2285 = vpack.c.b16 %v2233, %v2231
    %v2286 = vpack.c.b16 %v2236, %v2234
    %v2287 = vpack.c.b16 %v2237, %v2235
    %v2288 = vpack.c.b16 %v2240, %v2238
    %v2289 = vpack.c.b16 %v2241, %v2239
    %v2290 = vpack.c.b16 %v2244, %v2242
    %v2291 = vpack.c.b16 %v2245, %v2243
    %v2292 = vpack.c.b16 %v2248, %v2246
    %v2293 = vpack.c.b16 %v2249, %v2247
    %v2294 = vpack.c.b16 %v2252, %v2250
    %v2295 = vpack.c.b16 %v2253, %v2251
    %v2296 = vpack.c.b16 %v2256, %v2254
    %v2297 = vpack.c.b16 %v2257, %v2255
    %v2298 = vpack.c.b16 %v2260, %v2258
    %v2299 = vpack.c.b16 %v2261, %v2259
    %v2300 = vpack.c.b16 %v2264, %v2262
    %v2301 = vpack.c.b16 %v2265, %v2263
    %v2302 = vpack.c.b16 %v2268, %v2266
    %v2303 = vpack.c.b16 %v2269, %v2267
    %v2304 = vpack.c.b16 %v2272, %v2270
    %v2305 = vpack.c.b16 %v2273, %v2271
    %2338 = vmatprep.subr.bf16.mxu0 %v2275
    %2339 = vmatpush1.bf16.msra.mxu0 %v2274
    %2340 = vmatprep.subr.bf16.mxu0 %v2277
    %2341 = vmatpush1.bf16.msra.mxu0 %v2276
    %2342 = vmatprep.subr.bf16.mxu0 %v2279
    %2343 = vmatpush1.bf16.msra.mxu0 %v2278
    %2344 = vmatprep.subr.bf16.mxu0 %v2281
    %2345 = vmatpush1.bf16.msra.mxu0 %v2280
    %2346 = vmatprep.subr.bf16.mxu0 %v2283
    %2347 = vmatpush1.bf16.msra.mxu0 %v2282
    %2348 = vmatprep.subr.bf16.mxu0 %v2285
    %2349 = vmatpush1.bf16.msra.mxu0 %v2284
    %2350 = vmatprep.subr.bf16.mxu0 %v2287
    %2351 = vmatpush1.bf16.msra.mxu0 %v2286
    %2352 = vmatprep.subr.bf16.mxu0 %v2289
    %2353 = vmatpush1.bf16.msra.mxu0 %v2288
    %2354 = vmatprep.subr.bf16.mxu0 %v2291
    %2355 = vmatpush1.bf16.msra.mxu0 %v2290
    %2356 = vmatprep.subr.bf16.mxu0 %v2293
    %2357 = vmatpush1.bf16.msra.mxu0 %v2292
    %2358 = vmatprep.subr.bf16.mxu0 %v2295
    %2359 = vmatpush1.bf16.msra.mxu0 %v2294
    %2360 = vmatprep.subr.bf16.mxu0 %v2297
    %2361 = vmatpush1.bf16.msra.mxu0 %v2296
    %2362 = vmatprep.subr.bf16.mxu0 %v2299
    %2363 = vmatpush1.bf16.msra.mxu0 %v2298
    %2364 = vmatprep.subr.bf16.mxu0 %v2301
    %2365 = vmatpush1.bf16.msra.mxu0 %v2300
    %2366 = vmatprep.subr.bf16.mxu0 %v2303
    %2367 = vmatpush1.bf16.msra.mxu0 %v2302
    %2368 = vmatprep.subr.bf16.mxu0 %v2305
    %2369 = vmatpush1.bf16.msra.mxu0 %v2304
    %2370 = vmatprep.mubr.bf16.mxu0 %v2175
    %2371 = vmatmul.mubr.bf16.gmra.mrb[0].mxu0 %v2168
    %v2372 = vpop.f32.mrb[0].mxu0
    %v2373 = vadd.f32 0.0, %v2372
    %v2374 = vpop.f32.mrb[0].mxu0
    %v2375 = vadd.f32 0.0, %v2374
    %v2376 = vpop.f32.mrb[0].mxu0
    %v2377 = vpop.f32.mrb[0].mxu0
    %2378 = vdwg.mxu0
    %v2411 = vunpack.c.l.b16 %v2095
    %v2412 = vunpack.c.h.b16 %v2095
    %v2413 = vunpack.c.l.b16 %v2096
    %v2414 = vunpack.c.h.b16 %v2096
    %v2415 = vunpack.c.l.b16 %v2097
    %v2416 = vunpack.c.h.b16 %v2097
    %v2417 = vunpack.c.l.b16 %v2098
    %v2418 = vunpack.c.h.b16 %v2098
    %v2419 = vunpack.c.l.b16 %v2099
    %v2420 = vunpack.c.h.b16 %v2099
    %v2421 = vunpack.c.l.b16 %v2100
    %v2422 = vunpack.c.h.b16 %v2100
    %v2423 = vunpack.c.l.b16 %v2101
    %v2424 = vunpack.c.h.b16 %v2101
    %v2425 = vunpack.c.l.b16 %v2102
    %v2426 = vunpack.c.h.b16 %v2102
    %v2427 = vunpack.c.l.b16 %v2103
    %v2428 = vunpack.c.h.b16 %v2103
    %v2429 = vunpack.c.l.b16 %v2104
    %v2430 = vunpack.c.h.b16 %v2104
    %v2431 = vunpack.c.l.b16 %v2105
    %v2432 = vunpack.c.h.b16 %v2105
    %v2433 = vunpack.c.l.b16 %v2106
    %v2434 = vunpack.c.h.b16 %v2106
    %v2435 = vunpack.c.l.b16 %v2107
    %v2436 = vunpack.c.h.b16 %v2107
    %v2437 = vunpack.c.l.b16 %v2108
    %v2438 = vunpack.c.h.b16 %v2108
    %v2439 = vunpack.c.l.b16 %v2109
    %v2440 = vunpack.c.h.b16 %v2109
    %v2441 = vunpack.c.l.b16 %v2110
    %v2442 = vunpack.c.h.b16 %v2110
    %v2443 = vunpack.c.l.b16 %v2111
    %v2444 = vunpack.c.h.b16 %v2111
    %v2445 = vunpack.c.l.b16 %v2112
    %v2446 = vunpack.c.h.b16 %v2112
    %v2447 = vunpack.c.l.b16 %v2113
    %v2448 = vunpack.c.h.b16 %v2113
    %v2449 = vunpack.c.l.b16 %v2114
    %v2450 = vunpack.c.h.b16 %v2114
    %v2451 = vunpack.c.l.b16 %v2115
    %v2452 = vunpack.c.h.b16 %v2115
    %v2453 = vunpack.c.l.b16 %v2116
    %v2454 = vunpack.c.h.b16 %v2116
    %v2455 = vunpack.c.l.b16 %v2117
    %v2456 = vunpack.c.h.b16 %v2117
    %v2457 = vunpack.c.l.b16 %v2118
    %v2458 = vunpack.c.h.b16 %v2118
    %v2459 = vunpack.c.l.b16 %v2119
    %v2460 = vunpack.c.h.b16 %v2119
    %v2461 = vunpack.c.l.b16 %v2120
    %v2462 = vunpack.c.h.b16 %v2120
    %v2463 = vunpack.c.l.b16 %v2121
    %v2464 = vunpack.c.h.b16 %v2121
    %v2465 = vunpack.c.l.b16 %v2122
    %v2466 = vunpack.c.h.b16 %v2122
    %v2467 = vunpack.c.l.b16 %v2123
    %v2468 = vunpack.c.h.b16 %v2123
    %v2469 = vunpack.c.l.b16 %v2124
    %v2470 = vunpack.c.h.b16 %v2124
    %v2471 = vunpack.c.l.b16 %v2125
    %v2472 = vunpack.c.h.b16 %v2125
    %v2473 = vunpack.c.l.b16 %v2126
    %v2474 = vunpack.c.h.b16 %v2126
    %v2475 = vpack.c.b16 %v2413, %v2411
    %v2476 = vpack.c.b16 %v2414, %v2412
    %v2477 = vpack.c.b16 %v2417, %v2415
    %v2478 = vpack.c.b16 %v2418, %v2416
    %v2479 = vpack.c.b16 %v2421, %v2419
    %v2480 = vpack.c.b16 %v2422, %v2420
    %v2481 = vpack.c.b16 %v2425, %v2423
    %v2482 = vpack.c.b16 %v2426, %v2424
    %v2483 = vpack.c.b16 %v2429, %v2427
    %v2484 = vpack.c.b16 %v2430, %v2428
    %v2485 = vpack.c.b16 %v2433, %v2431
    %v2486 = vpack.c.b16 %v2434, %v2432
    %v2487 = vpack.c.b16 %v2437, %v2435
    %v2488 = vpack.c.b16 %v2438, %v2436
    %v2489 = vpack.c.b16 %v2441, %v2439
    %v2490 = vpack.c.b16 %v2442, %v2440
    %v2491 = vpack.c.b16 %v2445, %v2443
    %v2492 = vpack.c.b16 %v2446, %v2444
    %v2493 = vpack.c.b16 %v2449, %v2447
    %v2494 = vpack.c.b16 %v2450, %v2448
    %v2495 = vpack.c.b16 %v2453, %v2451
    %v2496 = vpack.c.b16 %v2454, %v2452
    %v2497 = vpack.c.b16 %v2457, %v2455
    %v2498 = vpack.c.b16 %v2458, %v2456
    %v2499 = vpack.c.b16 %v2461, %v2459
    %v2500 = vpack.c.b16 %v2462, %v2460
    %v2501 = vpack.c.b16 %v2465, %v2463
    %v2502 = vpack.c.b16 %v2466, %v2464
    %v2503 = vpack.c.b16 %v2469, %v2467
    %v2504 = vpack.c.b16 %v2470, %v2468
    %v2505 = vpack.c.b16 %v2473, %v2471
    %v2506 = vpack.c.b16 %v2474, %v2472
    %2539 = vmatprep.subr.bf16.mxu0 %v2476
    %2540 = vmatpush1.bf16.msra.mxu0 %v2475
    %2541 = vmatprep.subr.bf16.mxu0 %v2478
    %2542 = vmatpush1.bf16.msra.mxu0 %v2477
    %2543 = vmatprep.subr.bf16.mxu0 %v2480
    %2544 = vmatpush1.bf16.msra.mxu0 %v2479
    %2545 = vmatprep.subr.bf16.mxu0 %v2482
    %2546 = vmatpush1.bf16.msra.mxu0 %v2481
    %2547 = vmatprep.subr.bf16.mxu0 %v2484
    %2548 = vmatpush1.bf16.msra.mxu0 %v2483
    %2549 = vmatprep.subr.bf16.mxu0 %v2486
    %2550 = vmatpush1.bf16.msra.mxu0 %v2485
    %2551 = vmatprep.subr.bf16.mxu0 %v2488
    %2552 = vmatpush1.bf16.msra.mxu0 %v2487
    %2553 = vmatprep.subr.bf16.mxu0 %v2490
    %2554 = vmatpush1.bf16.msra.mxu0 %v2489
    %2555 = vmatprep.subr.bf16.mxu0 %v2492
    %2556 = vmatpush1.bf16.msra.mxu0 %v2491
    %2557 = vmatprep.subr.bf16.mxu0 %v2494
    %2558 = vmatpush1.bf16.msra.mxu0 %v2493
    %2559 = vmatprep.subr.bf16.mxu0 %v2496
    %2560 = vmatpush1.bf16.msra.mxu0 %v2495
    %2561 = vmatprep.subr.bf16.mxu0 %v2498
    %2562 = vmatpush1.bf16.msra.mxu0 %v2497
    %2563 = vmatprep.subr.bf16.mxu0 %v2500
    %2564 = vmatpush1.bf16.msra.mxu0 %v2499
    %2565 = vmatprep.subr.bf16.mxu0 %v2502
    %2566 = vmatpush1.bf16.msra.mxu0 %v2501
    %2567 = vmatprep.subr.bf16.mxu0 %v2504
    %2568 = vmatpush1.bf16.msra.mxu0 %v2503
    %2569 = vmatprep.subr.bf16.mxu0 %v2506
    %2570 = vmatpush1.bf16.msra.mxu0 %v2505
    %2571 = vmatprep.mubr.bf16.mxu0 %v2093
    %2572 = vmatmul.mubr.bf16.gmra.mrb[0].mxu0 %v2092
    %v2573 = vpop.f32.mrb[0].mxu0
    %v2574 = vadd.f32 %v2373, %v2573
    %v2575 = vpop.f32.mrb[0].mxu0
    %v2576 = vadd.f32 %v2375, %v2575
    %v2577 = vpop.f32.mrb[0].mxu0
    %v2578 = vpop.f32.mrb[0].mxu0
    %2579 = vdwg.mxu0
    %v2580 = vld [vmem:[#allocation2] sm:$0x1e]
    %v2581 = vld [vmem:[#allocation2 + $0x8] sm:$0x1e]
    %s2582 = scalar_lea.vmem [#allocation6], 2816
    %v2583 = vld [vmem:[%s2582] sm:$0xff]
    %v2584 = vld [vmem:[%s2582 + $0x8] sm:$0xff]
    %v2585 = vld [vmem:[%s2582 + $0x10] sm:$0xff]
    %v2586 = vld [vmem:[%s2582 + $0x18] sm:$0xff]
    %v2587 = vld [vmem:[%s2582 + $0x20] sm:$0xff]
    %v2588 = vld [vmem:[%s2582 + $0x28] sm:$0xff]
    %v2589 = vld [vmem:[%s2582 + $0x30] sm:$0xff]
    %v2590 = vld [vmem:[%s2582 + $0x38] sm:$0xff]
    %v2591 = vld [vmem:[%s2582 + $0x40] sm:$0xff]
    %v2592 = vld [vmem:[%s2582 + $0x48] sm:$0xff]
    %v2593 = vld [vmem:[%s2582 + $0x50] sm:$0xff]
    %v2594 = vld [vmem:[%s2582 + $0x58] sm:$0xff]
    %v2595 = vld [vmem:[%s2582 + $0x60] sm:$0xff]
    %v2596 = vld [vmem:[%s2582 + $0x68] sm:$0xff]
    %v2597 = vld [vmem:[%s2582 + $0x70] sm:$0xff]
    %v2598 = vld [vmem:[%s2582 + $0x78] sm:$0xff]
    %v2599 = vld [vmem:[%s2582 + $0x80] sm:$0xff]
    %v2600 = vld [vmem:[%s2582 + $0x88] sm:$0xff]
    %v2601 = vld [vmem:[%s2582 + $0x90] sm:$0xff]
    %v2602 = vld [vmem:[%s2582 + $0x98] sm:$0xff]
    %v2603 = vld [vmem:[%s2582 + $0xa0] sm:$0xff]
    %v2604 = vld [vmem:[%s2582 + $0xa8] sm:$0xff]
    %v2605 = vld [vmem:[%s2582 + $0xb0] sm:$0xff]
    %v2606 = vld [vmem:[%s2582 + $0xb8] sm:$0xff]
    %v2607 = vld [vmem:[%s2582 + $0xc0] sm:$0xff]
    %v2608 = vld [vmem:[%s2582 + $0xc8] sm:$0xff]
    %v2609 = vld [vmem:[%s2582 + $0xd0] sm:$0xff]
    %v2610 = vld [vmem:[%s2582 + $0xd8] sm:$0xff]
    %v2611 = vld [vmem:[%s2582 + $0xe0] sm:$0xff]
    %v2612 = vld [vmem:[%s2582 + $0xe8] sm:$0xff]
    %v2613 = vld [vmem:[%s2582 + $0xf0] sm:$0xff]
    %v2614 = vld [vmem:[%s2582 + $0xf8] sm:$0xff]
    %v2617 = vrot.slane %v2580, 1
    %v2618 = vrot.slane %v2581, 1
    %v2653 = vunpack.c.l.b16 %v2583
    %v2654 = vunpack.c.h.b16 %v2583
    %v2655 = vunpack.c.l.b16 %v2584
    %v2656 = vunpack.c.h.b16 %v2584
    %v2657 = vunpack.c.l.b16 %v2585
    %v2658 = vunpack.c.h.b16 %v2585
    %v2659 = vunpack.c.l.b16 %v2586
    %v2660 = vunpack.c.h.b16 %v2586
    %v2661 = vunpack.c.l.b16 %v2587
    %v2662 = vunpack.c.h.b16 %v2587
    %v2663 = vunpack.c.l.b16 %v2588
    %v2664 = vunpack.c.h.b16 %v2588
    %v2665 = vunpack.c.l.b16 %v2589
    %v2666 = vunpack.c.h.b16 %v2589
    %v2667 = vunpack.c.l.b16 %v2590
    %v2668 = vunpack.c.h.b16 %v2590
    %v2669 = vunpack.c.l.b16 %v2591
    %v2670 = vunpack.c.h.b16 %v2591
    %v2671 = vunpack.c.l.b16 %v2592
    %v2672 = vunpack.c.h.b16 %v2592
    %v2673 = vunpack.c.l.b16 %v2593
    %v2674 = vunpack.c.h.b16 %v2593
    %v2675 = vunpack.c.l.b16 %v2594
    %v2676 = vunpack.c.h.b16 %v2594
    %v2677 = vunpack.c.l.b16 %v2595
    %v2678 = vunpack.c.h.b16 %v2595
    %v2679 = vunpack.c.l.b16 %v2596
    %v2680 = vunpack.c.h.b16 %v2596
    %v2681 = vunpack.c.l.b16 %v2597
    %v2682 = vunpack.c.h.b16 %v2597
    %v2683 = vunpack.c.l.b16 %v2598
    %v2684 = vunpack.c.h.b16 %v2598
    %v2685 = vunpack.c.l.b16 %v2599
    %v2686 = vunpack.c.h.b16 %v2599
    %v2687 = vunpack.c.l.b16 %v2600
    %v2688 = vunpack.c.h.b16 %v2600
    %v2689 = vunpack.c.l.b16 %v2601
    %v2690 = vunpack.c.h.b16 %v2601
    %v2691 = vunpack.c.l.b16 %v2602
    %v2692 = vunpack.c.h.b16 %v2602
    %v2693 = vunpack.c.l.b16 %v2603
    %v2694 = vunpack.c.h.b16 %v2603
    %v2695 = vunpack.c.l.b16 %v2604
    %v2696 = vunpack.c.h.b16 %v2604
    %v2697 = vunpack.c.l.b16 %v2605
    %v2698 = vunpack.c.h.b16 %v2605
    %v2699 = vunpack.c.l.b16 %v2606
    %v2700 = vunpack.c.h.b16 %v2606
    %v2701 = vunpack.c.l.b16 %v2607
    %v2702 = vunpack.c.h.b16 %v2607
    %v2703 = vunpack.c.l.b16 %v2608
    %v2704 = vunpack.c.h.b16 %v2608
    %v2705 = vunpack.c.l.b16 %v2609
    %v2706 = vunpack.c.h.b16 %v2609
    %v2707 = vunpack.c.l.b16 %v2610
    %v2708 = vunpack.c.h.b16 %v2610
    %v2709 = vunpack.c.l.b16 %v2611
    %v2710 = vunpack.c.h.b16 %v2611
    %v2711 = vunpack.c.l.b16 %v2612
    %v2712 = vunpack.c.h.b16 %v2612
    %v2713 = vunpack.c.l.b16 %v2613
    %v2714 = vunpack.c.h.b16 %v2613
    %v2715 = vunpack.c.l.b16 %v2614
    %v2716 = vunpack.c.h.b16 %v2614
    %v2717 = vpack.c.b16 %v2655, %v2653
    %v2718 = vpack.c.b16 %v2656, %v2654
    %v2719 = vpack.c.b16 %v2659, %v2657
    %v2720 = vpack.c.b16 %v2660, %v2658
    %v2721 = vpack.c.b16 %v2663, %v2661
    %v2722 = vpack.c.b16 %v2664, %v2662
    %v2723 = vpack.c.b16 %v2667, %v2665
    %v2724 = vpack.c.b16 %v2668, %v2666
    %v2725 = vpack.c.b16 %v2671, %v2669
    %v2726 = vpack.c.b16 %v2672, %v2670
    %v2727 = vpack.c.b16 %v2675, %v2673
    %v2728 = vpack.c.b16 %v2676, %v2674
    %v2729 = vpack.c.b16 %v2679, %v2677
    %v2730 = vpack.c.b16 %v2680, %v2678
    %v2731 = vpack.c.b16 %v2683, %v2681
    %v2732 = vpack.c.b16 %v2684, %v2682
    %v2733 = vpack.c.b16 %v2687, %v2685
    %v2734 = vpack.c.b16 %v2688, %v2686
    %v2735 = vpack.c.b16 %v2691, %v2689
    %v2736 = vpack.c.b16 %v2692, %v2690
    %v2737 = vpack.c.b16 %v2695, %v2693
    %v2738 = vpack.c.b16 %v2696, %v2694
    %v2739 = vpack.c.b16 %v2699, %v2697
    %v2740 = vpack.c.b16 %v2700, %v2698
    %v2741 = vpack.c.b16 %v2703, %v2701
    %v2742 = vpack.c.b16 %v2704, %v2702
    %v2743 = vpack.c.b16 %v2707, %v2705
    %v2744 = vpack.c.b16 %v2708, %v2706
    %v2745 = vpack.c.b16 %v2711, %v2709
    %v2746 = vpack.c.b16 %v2712, %v2710
    %v2747 = vpack.c.b16 %v2715, %v2713
    %v2748 = vpack.c.b16 %v2716, %v2714
    %2781 = vmatprep.subr.bf16.mxu0 %v2718
    %2782 = vmatpush1.bf16.msra.mxu0 %v2717
    %2783 = vmatprep.subr.bf16.mxu0 %v2720
    %2784 = vmatpush1.bf16.msra.mxu0 %v2719
    %2785 = vmatprep.subr.bf16.mxu0 %v2722
    %2786 = vmatpush1.bf16.msra.mxu0 %v2721
    %2787 = vmatprep.subr.bf16.mxu0 %v2724
    %2788 = vmatpush1.bf16.msra.mxu0 %v2723
    %2789 = vmatprep.subr.bf16.mxu0 %v2726
    %2790 = vmatpush1.bf16.msra.mxu0 %v2725
    %2791 = vmatprep.subr.bf16.mxu0 %v2728
    %2792 = vmatpush1.bf16.msra.mxu0 %v2727
    %2793 = vmatprep.subr.bf16.mxu0 %v2730
    %2794 = vmatpush1.bf16.msra.mxu0 %v2729
    %2795 = vmatprep.subr.bf16.mxu0 %v2732
    %2796 = vmatpush1.bf16.msra.mxu0 %v2731
    %2797 = vmatprep.subr.bf16.mxu0 %v2734
    %2798 = vmatpush1.bf16.msra.mxu0 %v2733
    %2799 = vmatprep.subr.bf16.mxu0 %v2736
    %2800 = vmatpush1.bf16.msra.mxu0 %v2735
    %2801 = vmatprep.subr.bf16.mxu0 %v2738
    %2802 = vmatpush1.bf16.msra.mxu0 %v2737
    %2803 = vmatprep.subr.bf16.mxu0 %v2740
    %2804 = vmatpush1.bf16.msra.mxu0 %v2739
    %2805 = vmatprep.subr.bf16.mxu0 %v2742
    %2806 = vmatpush1.bf16.msra.mxu0 %v2741
    %2807 = vmatprep.subr.bf16.mxu0 %v2744
    %2808 = vmatpush1.bf16.msra.mxu0 %v2743
    %2809 = vmatprep.subr.bf16.mxu0 %v2746
    %2810 = vmatpush1.bf16.msra.mxu0 %v2745
    %2811 = vmatprep.subr.bf16.mxu0 %v2748
    %2812 = vmatpush1.bf16.msra.mxu0 %v2747
    %2813 = vmatprep.mubr.bf16.mxu0 %v2618
    %2814 = vmatmul.mubr.bf16.gmra.mrb[0].mxu0 %v2617
    %v2815 = vpop.f32.mrb[0].mxu0
    %v2816 = vadd.f32 0.0, %v2815
    %v2817 = vpop.f32.mrb[0].mxu0
    %v2818 = vadd.f32 0.0, %v2817
    %v2819 = vpop.f32.mrb[0].mxu0
    %v2820 = vpop.f32.mrb[0].mxu0
    %2821 = vdwg.mxu0
    %v2822 = vadd.f32 %v2574, %v2816
    %v2823 = vadd.f32 %v2576, %v2818
    %s2824 = scalar_lea.vmem [#allocation8], 3
    %v2825 = vld [vmem:[%s2824] ss:$4 sm:$0x3]
    %v2827 = vlaneseq
    %v2828 = vshrl.u32 %v2827, 7
    %v2829 = vsub.s32 0, %v2828
    %v2830 = vrot.slane %v2825, %v2829
    %v2831 = vlaneseq
    %v2832 = vshrl.u32 %v2831, 7
    %v2833 = vsub.s32 1, %v2832
    %v2834 = vrot.slane %v2825, %v2833
    %v2837 = vadd.f32 %v2822, %v2830
    %v2838 = vadd.f32 %v2823, %v2834
    %v2839 = vmax.f32 %v2837, 0.0
    %v2840 = vmax.f32 %v2838, 0.0
    %2841 = vst [vmem:[#allocation12] sm:$0xff] %v2839
    %2842 = vst [vmem:[#allocation12 + $0x8] sm:$0xff] %v2840
    // Predicated region
    $region42: #{tpu_custom_call.1} parent=1 // pred_check
      _
    $region43: #{tpu_custom_call.1} parent=1 // pred_check_branch
      %2844 = sbr.rel (0) target = $region45
    $region44: #{tpu_custom_call.1} parent=1 // pred_region
      %s2846 = ssub.s32 256, 256
      %2847 = vsyncadd [#allocation5], %s2846
      %s2849 = sshll.u32 [#allocation12], 4
      %s2850 = int_to_ptr.vmem [resolvable:$true] %s2849
      %2852 = dma.vmem_to_hbm [thread:$0]  %s2850, 256, %s5, [#allocation5]
    $region45: #{tpu_custom_call.1} parent=1 // pred_fallthru
      _
    // Predicated region
    $region46: #{tpu_custom_call.1} parent=1 // pred_check
      _
    $region47: #{tpu_custom_call.1} parent=1 // pred_check_branch
      %2854 = sbr.rel (0) target = $region49
    $region48: #{tpu_custom_call.1} parent=1 // pred_region
      %2855 = dma.done [#allocation5], 256
    $region49: #{tpu_custom_call.1} parent=1 // pred_fallthru
      _
    %2856 = vsyncpa [#allocation4], 1
    %2857 = vsyncpa [#allocation7], 1
    %2858 = vsyncpa [#allocation10], 1
    %2859 = vsyncpa [#allocation5], 1

</llo_original>
